<compile_context>
chip_gen: v7x
topology: tpu7x:2x2x1
jax: 0.10.0
libtpu: 0.0.40
codegen_flags: <defaults>
</compile_context>

<pallas_src>
import numpy as np
import jax
import jax.numpy as jnp
from jax.experimental import pallas as pl
from jax.experimental.pallas import tpu as pltpu

N_HEADS = 4   # GAT hard-codes self.n_heads = 4 regardless of the ctor argument

# Cast MXU operands to bf16 (f32 accumulation) — worthwhile on v6e/v7x, kept
# off by default so the demo matches the f32 reference to tight tolerance.
MXU_BF16 = False


def _mm(x, w):
    """MXU matmul with f32 accumulation (optionally bf16 inputs)."""
    if MXU_BF16:
        x = x.astype(jnp.bfloat16)
        w = w.astype(jnp.bfloat16)
    return jnp.dot(x, w, preferred_element_type=jnp.float32)


# ----------------------------------------------------------------------------
# Pallas kernel: full GAT forward for one (padded) segment per grid step.
# ----------------------------------------------------------------------------
def _gat_batched_kernel(lens_ref,                     # SMEM [S] int32 (scalar prefetch)
                        ahs_ref, ghs_ref, ag_ref,      # [1,n,H] [1,n,H] [1,n,4]
                        wdu_ref, wdv_ref, bd_ref,      # [4,D] [4,D] [1,D]
                        wg_ref, bg_ref,                # [D,H] [1,H]
                        wa1_ref, wa2_ref,              # [H,nh] [H,nh]
                        wproj_ref, bias_ref,           # [nh*H,128] [1,128]
                        out_ref):                      # [1,n,128]
    seg = pl.program_id(0)
    n_valid = lens_ref[seg]                  # real number of agents in this segment
    n = ahs_ref.shape[1]                     # padded segment size (max_n)
    H = ahs_ref.shape[2]
    n_heads = wa1_ref.shape[-1]

    ahs = ahs_ref[0]                         # [n, H]  action hidden state (zero-padded)
    ghs = ghs_ref[0]                         # [n, H]  goal hidden state
    ag = ag_ref[0]                           # [n, 4]  concat(action, goal)

    # ---- InteractionGate.cal_gate ------------------------------------------
    # dist[i, j] = concat(action[i], goal[i], action[j], goal[j])
    # distEmbedding(dist) = u[i] + v[j] + bd   (8xD weight split in the wrapper)
    u = _mm(ag, wdu_ref[...])                                              # [n, D]
    v = _mm(ag, wdv_ref[...])                                              # [n, D]
    g = jnp.maximum(u[:, None, :] + v[None, :, :] + bd_ref[...], 0.0)      # [n, n, D]
    D = g.shape[-1]
    gate = jax.nn.sigmoid(_mm(g.reshape(n * n, D), wg_ref[...]) + bg_ref[...])
    gate = gate.reshape(n, n, H)                                           # [n, n, H]

    # ---- InteractionGate.forward -------------------------------------------
    # gated_h[i, j] = ghs[i] if i == j else gate[i, j] * tanh(ahs[j])
    tanh_a = jnp.tanh(ahs)                                                 # [n, H]
    gate_action = gate * tanh_a[None, :, :]                                # [n, n, H]
    eye = (jax.lax.broadcasted_iota(jnp.int32, (n, n), 0) ==
           jax.lax.broadcasted_iota(jnp.int32, (n, n), 1)
           ).astype(jnp.float32)[:, :, None]                               # [n, n, 1]
    gated_h = eye * ghs[None, :, :] + (1.0 - eye) * gate_action            # [n, n, H]

    # ---- GraphAttentionLayer: fused-head attention logits -------------------
    # h_other column j=0 is ahs itself; columns j>=1 are gated_h[:, j-1].
    # e[i, j, k] = ahs[i] @ (w_k @ a1) + h_other[i, j] @ (w_k @ a2)
    e_a1 = _mm(ahs, wa1_ref[...])                                          # [n, nh]
    e0 = e_a1 + _mm(ahs, wa2_ref[...])                                     # [n, nh]   (self col)
    e_rest = e_a1[:, None, :] + _mm(gated_h.reshape(n * n, H),
                                    wa2_ref[...]).reshape(n, n, n_heads)   # [n, n, nh]

    # LeakyReLU(0.2), mask padded neighbour columns, softmax over (n+1) cols
    # (computed piecewise: self column vs the n neighbour columns).
    e0 = jnp.where(e0 > 0, e0, 0.2 * e0)
    e_rest = jnp.where(e_rest > 0, e_rest, 0.2 * e_rest)
    col = jax.lax.broadcasted_iota(jnp.int32, (n, n), 1)[:, :, None]       # [n, n, 1]
    e_rest = jnp.where(col < n_valid, e_rest, -1e30)

    m = jnp.maximum(e0, jnp.max(e_rest, axis=1))                           # [n, nh]
    p0 = jnp.exp(e0 - m)                                                   # [n, nh]
    pr = jnp.exp(e_rest - m[:, None, :])                                   # [n, n, nh]
    inv = pl.reciprocal(p0 + jnp.sum(pr, axis=1), approx=True)             # [n, nh]
    alpha0 = p0 * inv                                                      # [n, nh]
    alphar = pr * inv[:, None, :]                                          # [n, n, nh]

    # ---- aggregate-then-project ---------------------------------------------
    # agg_k = alpha0_k * ahs + sum_j alphar_k[:, j] * gated_h[:, j]    [n, H]
    # out   = relu(mean_k agg_k @ w_k) + bias
    #       = relu((concat_k agg_k) @ w_proj * (1/nh)) + bias           (lane-dense)
    aggs = []
    for k in range(n_heads):                 # static unroll, tiny VPU/XLU bodies
        aggs.append(alpha0[:, k:k + 1] * ahs +
                    jnp.sum(alphar[:, :, k:k + 1] * gated_h, axis=1))
    agg_cat = jnp.concatenate(aggs, axis=-1)                               # [n, nh*H] = [n, 128]

    acc = _mm(agg_cat, wproj_ref[...])                                     # [n, 128]
    out = jnp.maximum(acc * (1.0 / n_heads), 0.0) + bias_ref[...]          # [n, 128]
    out_ref[0, :, :] = out.astype(out_ref.dtype)


# ----------------------------------------------------------------------------
# Wrapper: fold parameters, pad/stack segments, one gridded pallas_call.
# ----------------------------------------------------------------------------
def fold_params(p):
    """Fold raw module parameters into the kernel's fused / lane-padded form."""
    nh, H, _ = p['w'].shape
    out_w = ((H + 127) // 128) * 128
    a1 = p['a1'].reshape(-1)
    a2 = p['a2'].reshape(-1)
    wa1 = jnp.einsum('khf,f->hk', p['w'], a1)                    # [H, nh] = w_k @ a1
    wa2 = jnp.einsum('khf,f->hk', p['w'], a2)                    # [H, nh] = w_k @ a2
    wproj = jnp.zeros((nh * H, out_w), jnp.float32).at[:, :H].set(
        p['w'].reshape(nh * H, H))                               # [nh*H, 128] zero-padded
    bias = jnp.zeros((1, out_w), jnp.float32).at[:, :H].set(p['bias'])
    return dict(wdu=p['wd'][0:4], wdv=p['wd'][4:8], bd=p['bd'],
                wg=p['wg'], bg=p['bg'], wa1=wa1, wa2=wa2,
                wproj=wproj, bias=bias)


def attention_forward(action_h, goal_h, goal, action, seq_start_end, params):
    """Equivalent of Attention.forward: one gridded Pallas kernel over segments."""
    H = action_h.shape[1]
    starts = [int(s) for s, _ in seq_start_end]
    lens = [int(e) - int(s) for s, e in seq_start_end]
    S = len(lens)
    max_n = max(8, ((max(lens) + 7) // 8) * 8)          # sublane-aligned padded size
    # TODO(synk): for very large segments (crowded scenes) tile the neighbour
    # axis with an online softmax so the [n, n, H] intermediates fit v7x's
    # 64 MiB VMEM; unnecessary at typical pedestrian-scene sizes.

    ag = jnp.concatenate([action, goal], axis=-1)       # [N, 4]

    def pad(x, start, length):
        return jnp.pad(x[start:start + length], ((0, max_n - length), (0, 0)))

    ahs_p = jnp.stack([pad(action_h, s, l) for s, l in zip(starts, lens)])  # [S, max_n, H]
    ghs_p = jnp.stack([pad(goal_h, s, l) for s, l in zip(starts, lens)])    # [S, max_n, H]
    ag_p = jnp.stack([pad(ag, s, l) for s, l in zip(starts, lens)])         # [S, max_n, 4]
    lens_arr = jnp.asarray(lens, dtype=jnp.int32)

    fp = fold_params(params)
    out_w = fp['wproj'].shape[-1]

    def seg_spec(last):
        return pl.BlockSpec((1, max_n, last), lambda s, L: (s, 0, 0))

    def const_spec(arr):
        return pl.BlockSpec(arr.shape, lambda s, L: (0, 0))

    grid_spec = pltpu.PrefetchScalarGridSpec(
        num_scalar_prefetch=1,
        grid=(S,),
        in_specs=[seg_spec(H), seg_spec(H), seg_spec(4),
                  const_spec(fp['wdu']), const_spec(fp['wdv']), const_spec(fp['bd']),
                  const_spec(fp['wg']), const_spec(fp['bg']),
                  const_spec(fp['wa1']), const_spec(fp['wa2']),
                  const_spec(fp['wproj']), const_spec(fp['bias'])],
        out_specs=pl.BlockSpec((1, max_n, out_w), lambda s, L: (s, 0, 0)),
    )

    out_pad = pl.pallas_call(
        _gat_batched_kernel,
        out_shape=jax.ShapeDtypeStruct((S, max_n, out_w), jnp.float32),
        grid_spec=grid_spec,
        compiler_params=pltpu.CompilerParams(dimension_semantics=("parallel",)),
    )(lens_arr, ahs_p, ghs_p, ag_p,
      fp['wdu'], fp['wdv'], fp['bd'], fp['wg'], fp['bg'],
      fp['wa1'], fp['wa2'], fp['wproj'], fp['bias'])

    return jnp.concatenate([out_pad[i, :l, :H] for i, l in enumerate(lens)], axis=0)


# ----------------------------------------------------------------------------
# Pure-JAX reference that mirrors the PyTorch forward literally (for checking)
# ----------------------------------------------------------------------------
def gat_reference(ahs, ghs, goal, action, p):
    n, H = ahs.shape
    # InteractionGate.cal_gate
    goal1 = jnp.broadcast_to(goal[None], (n, n, goal.shape[-1]))
    action1 = jnp.broadcast_to(action[None], (n, n, action.shape[-1]))
    goal2 = jnp.transpose(goal1, (1, 0, 2))
    action2 = jnp.transpose(action1, (1, 0, 2))
    dist = jnp.concatenate([action2, goal2, action1, goal1], axis=-1)      # [n,n,8]
    gate = jax.nn.relu(dist @ p['wd'] + p['bd'])
    gate = jax.nn.sigmoid(gate @ p['wg'] + p['bg'])                        # [n,n,H]
    # InteractionGate.forward
    temp_action_1 = jnp.broadcast_to(ahs[None], (n, n, H))
    gate_action = gate * jnp.tanh(temp_action_1)
    temp_goal = jnp.broadcast_to(ghs[None], (n, n, H))
    mask_goal = jnp.eye(n)[:, :, None] * jnp.ones((1, 1, H))
    gated_h = mask_goal * temp_goal + (1.0 - mask_goal) * gate_action
    # GAT.forward
    h_self = jnp.broadcast_to(ahs[:, None, :], (n, n + 1, H))
    h_other = jnp.concatenate([ahs[:, None, :], gated_h], axis=1)
    # GraphAttentionLayer.forward
    w = p['w'][:, None]                                                    # [4,1,H,H]
    a = jnp.concatenate([p['a1'], p['a2']], axis=-1).reshape(1, 1, 2 * H, 1)
    h_self_prime = jnp.matmul(h_self, w)                                   # [4,n,n+1,H]
    h_other_prime = jnp.matmul(h_other, w)
    h_prime = jnp.concatenate([h_self_prime, h_other_prime], axis=-1)
    h_prime = jnp.matmul(h_prime, a)                                       # [4,n,n+1,1]
    lrelu = jnp.where(h_prime > 0, h_prime, 0.2 * h_prime)
    alpha = jax.nn.softmax(lrelu, axis=-2)
    h_attn = jnp.matmul(h_other, w)
    h_attn = alpha * h_attn
    output = jnp.mean(jnp.sum(h_attn, axis=-2), axis=0)
    output = jax.nn.relu(output)
    return output + p['bias'][0]


def attention_reference(action_h, goal_h, goal, action, seq_start_end, params):
    outs = []
    for start, end in seq_start_end:
        outs.append(gat_reference(action_h[start:end], goal_h[start:end],
                                  goal[start:end], action[start:end], params))
    return jnp.concatenate(outs, axis=0)


# ----------------------------------------------------------------------------
# Deterministic parameter construction (synthetic; shapes match module __init__)
# ----------------------------------------------------------------------------
def make_params(key, H, D):
    ks = jax.random.split(key, 6)
    wd = jax.random.normal(ks[0], (8, D), jnp.float32) * 0.3        # distEmbedding
    bd = jax.random.normal(ks[1], (1, D), jnp.float32) * 0.1
    wg = jax.random.normal(ks[2], (D, H), jnp.float32) * 0.3        # gateFC
    bg = jax.random.normal(ks[3], (1, H), jnp.float32) * 0.1
    w = jax.random.normal(ks[4], (N_HEADS, H, H), jnp.float32) * (1.414 / np.sqrt(H))
    a = jax.random.normal(ks[5], (2 * H,), jnp.float32) * 0.3       # attention vector
    return dict(
        wd=wd, bd=bd, wg=wg, bg=bg, w=w,
        a1=a[:H].reshape(1, H), a2=a[H:].reshape(1, H),
        bias=jnp.zeros((1, H), jnp.float32),                        # init constant 0
    )


if __name__ == "__main__":
    H = 32    # action_decoder_hidden_dim (== f_in == f_out);  4 heads -> 4H = 128 lanes
    D = 16    # distance_embedding_dim
    N = 8     # total agents across all sequences

    key = jax.random.PRNGKey(0)
    k1, k2, k3, k4, kp = jax.random.split(key, 5)
    action_h = jax.random.normal(k1, (N, H), jnp.float32)
    goal_h = jax.random.normal(k2, (N, H), jnp.float32)
    goal = jax.random.normal(k3, (N, 2), jnp.float32)
    action = jax.random.normal(k4, (N, 2), jnp.float32)
    seq_start_end = [(0, 3), (3, 8)]     # two sequences: 3 and 5 agents

    params = make_params(kp, H, D)

    out = attention_forward(action_h, goal_h, goal, action, seq_start_end, params)
    out = jax.block_until_ready(out)

    ref = attention_reference(action_h, goal_h, goal, action, seq_start_end, params)
    ref = jax.block_until_ready(ref)

    # Tolerance loosened slightly vs pure-f32 because the kernel uses the EUP
    # approximate reciprocal (pl.reciprocal(approx=True)) for the softmax norm.
    np.testing.assert_allclose(np.asarray(out), np.asarray(ref),
                               rtol=5e-3, atol=5e-3)
    assert out.shape == (N, H)
    print("KERNEL_OK")
</pallas_src>

<mosaic_0001>
module attributes {stable_mosaic.version = 11 : i64} {
  func.func @_gat_batched_kernel(%arg0: i32, %arg1: memref<2xi32, #tpu.memory_space<smem>>, %arg2: memref<1x8x32xf32, #tpu.memory_space<vmem>>, %arg3: memref<1x8x32xf32, #tpu.memory_space<vmem>>, %arg4: memref<1x8x4xf32, #tpu.memory_space<vmem>>, %arg5: memref<4x16xf32, #tpu.memory_space<vmem>>, %arg6: memref<4x16xf32, #tpu.memory_space<vmem>>, %arg7: memref<1x16xf32, #tpu.memory_space<vmem>>, %arg8: memref<16x32xf32, #tpu.memory_space<vmem>>, %arg9: memref<1x32xf32, #tpu.memory_space<vmem>>, %arg10: memref<32x4xf32, #tpu.memory_space<vmem>>, %arg11: memref<32x4xf32, #tpu.memory_space<vmem>>, %arg12: memref<128x128xf32, #tpu.memory_space<vmem>>, %arg13: memref<1x128xf32, #tpu.memory_space<vmem>>, %arg14: memref<1x8x128xf32, #tpu.memory_space<vmem>>) attributes {dimension_semantics = [#tpu.dimension_semantics<parallel>], iteration_bounds = array<i64: 2>, scalar_prefetch = 1 : i64, scratch_operands = 0 : i64, tpu.core_type = #tpu.core_type<tc>, window_params = [{transform_indices = @transform_0, window_bounds = array<i64: 1, 8, 32>}, {transform_indices = @transform_1, window_bounds = array<i64: 1, 8, 32>}, {transform_indices = @transform_2, window_bounds = array<i64: 1, 8, 4>}, {pipeline_mode = #tpu.pipeline_mode<synchronous>, transform_indices = @transform_3, window_bounds = array<i64: 4, 16>}, {pipeline_mode = #tpu.pipeline_mode<synchronous>, transform_indices = @transform_4, window_bounds = array<i64: 4, 16>}, {pipeline_mode = #tpu.pipeline_mode<synchronous>, transform_indices = @transform_5, window_bounds = array<i64: 1, 16>}, {pipeline_mode = #tpu.pipeline_mode<synchronous>, transform_indices = @transform_6, window_bounds = array<i64: 16, 32>}, {pipeline_mode = #tpu.pipeline_mode<synchronous>, transform_indices = @transform_7, window_bounds = array<i64: 1, 32>}, {pipeline_mode = #tpu.pipeline_mode<synchronous>, transform_indices = @transform_8, window_bounds = array<i64: 32, 4>}, {pipeline_mode = #tpu.pipeline_mode<synchronous>, transform_indices = @transform_9, window_bounds = array<i64: 32, 4>}, {pipeline_mode = #tpu.pipeline_mode<synchronous>, transform_indices = @transform_10, window_bounds = array<i64: 128, 128>}, {pipeline_mode = #tpu.pipeline_mode<synchronous>, transform_indices = @transform_11, window_bounds = array<i64: 1, 128>}, {transform_indices = @transform_12, window_bounds = array<i64: 1, 8, 128>}]} {
    %0 = arith.index_cast %arg0 : i32 to index
    %1 = memref.load %arg1[%0] : memref<2xi32, #tpu.memory_space<smem>>
    %c0 = arith.constant 0 : index
    %c0_0 = arith.constant 0 : index
    %c0_1 = arith.constant 0 : index
    %2 = vector.load %arg2[%c0, %c0_0, %c0_1] : memref<1x8x32xf32, #tpu.memory_space<vmem>>, vector<1x8x32xf32>
    %3 = vector.shape_cast %2 : vector<1x8x32xf32> to vector<8x32xf32>
    %c0_2 = arith.constant 0 : index
    %c0_3 = arith.constant 0 : index
    %c0_4 = arith.constant 0 : index
    %4 = vector.load %arg3[%c0_2, %c0_3, %c0_4] : memref<1x8x32xf32, #tpu.memory_space<vmem>>, vector<1x8x32xf32>
    %5 = vector.shape_cast %4 : vector<1x8x32xf32> to vector<8x32xf32>
    %c0_5 = arith.constant 0 : index
    %c0_6 = arith.constant 0 : index
    %c0_7 = arith.constant 0 : index
    %6 = vector.load %arg4[%c0_5, %c0_6, %c0_7] : memref<1x8x4xf32, #tpu.memory_space<vmem>>, vector<1x8x4xf32>
    %7 = vector.shape_cast %6 : vector<1x8x4xf32> to vector<8x4xf32>
    %c0_8 = arith.constant 0 : index
    %c0_9 = arith.constant 0 : index
    %8 = vector.load %arg5[%c0_8, %c0_9] : memref<4x16xf32, #tpu.memory_space<vmem>>, vector<4x16xf32>
    %cst = arith.constant dense<0.000000e+00> : vector<8x16xf32>
    %9 = tpu.matmul %7, %8, %cst {dimension_numbers = #tpu.dot_dimension_numbers<[1], [0], [0], [1], [0, 0, 1, 1], [], []>} : vector<8x4xf32>, vector<4x16xf32>, vector<8x16xf32> -> vector<8x16xf32>
    %c0_10 = arith.constant 0 : index
    %c0_11 = arith.constant 0 : index
    %10 = vector.load %arg6[%c0_10, %c0_11] : memref<4x16xf32, #tpu.memory_space<vmem>>, vector<4x16xf32>
    %cst_12 = arith.constant dense<0.000000e+00> : vector<8x16xf32>
    %11 = tpu.matmul %7, %10, %cst_12 {dimension_numbers = #tpu.dot_dimension_numbers<[1], [0], [0], [1], [0, 0, 1, 1], [], []>} : vector<8x4xf32>, vector<4x16xf32>, vector<8x16xf32> -> vector<8x16xf32>
    %12 = vector.shape_cast %9 : vector<8x16xf32> to vector<8x1x16xf32>
    %13 = vector.shape_cast %11 : vector<8x16xf32> to vector<1x8x16xf32>
    %14 = vector.broadcast %12 : vector<8x1x16xf32> to vector<8x8x16xf32>
    %15 = vector.broadcast %13 : vector<1x8x16xf32> to vector<8x8x16xf32>
    %16 = arith.addf %14, %15 : vector<8x8x16xf32>
    %c0_13 = arith.constant 0 : index
    %c0_14 = arith.constant 0 : index
    %17 = vector.load %arg7[%c0_13, %c0_14] : memref<1x16xf32, #tpu.memory_space<vmem>>, vector<1x16xf32>
    %18 = vector.shape_cast %17 : vector<1x16xf32> to vector<1x1x16xf32>
    %19 = vector.broadcast %18 : vector<1x1x16xf32> to vector<8x8x16xf32>
    %20 = arith.addf %16, %19 : vector<8x8x16xf32>
    %cst_15 = arith.constant 0.000000e+00 : f32
    %21 = vector.broadcast %cst_15 : f32 to vector<8x8x16xf32>
    %22 = arith.maximumf %20, %21 : vector<8x8x16xf32>
    %23 = vector.shape_cast %22 : vector<8x8x16xf32> to vector<64x16xf32>
    %c0_16 = arith.constant 0 : index
    %c0_17 = arith.constant 0 : index
    %24 = vector.load %arg8[%c0_16, %c0_17] : memref<16x32xf32, #tpu.memory_space<vmem>>, vector<16x32xf32>
    %cst_18 = arith.constant dense<0.000000e+00> : vector<64x32xf32>
    %25 = tpu.matmul %23, %24, %cst_18 {dimension_numbers = #tpu.dot_dimension_numbers<[1], [0], [0], [1], [0, 0, 1, 1], [], []>} : vector<64x16xf32>, vector<16x32xf32>, vector<64x32xf32> -> vector<64x32xf32>
    %c0_19 = arith.constant 0 : index
    %c0_20 = arith.constant 0 : index
    %26 = vector.load %arg9[%c0_19, %c0_20] : memref<1x32xf32, #tpu.memory_space<vmem>>, vector<1x32xf32>
    %27 = vector.broadcast %26 : vector<1x32xf32> to vector<64x32xf32>
    %28 = arith.addf %25, %27 : vector<64x32xf32>
    %29 = arith.negf %28 : vector<64x32xf32>
    %30 = math.exp %29 : vector<64x32xf32>
    %cst_21 = arith.constant 1.000000e+00 : f32
    %31 = vector.broadcast %cst_21 : f32 to vector<64x32xf32>
    %32 = arith.addf %31, %30 : vector<64x32xf32>
    %33 = arith.divf %31, %32 : vector<64x32xf32>
    %34 = vector.shape_cast %33 : vector<64x32xf32> to vector<8x8x32xf32>
    %35 = math.tanh %3 : vector<8x32xf32>
    %36 = vector.shape_cast %35 : vector<8x32xf32> to vector<1x8x32xf32>
    %37 = vector.broadcast %36 : vector<1x8x32xf32> to vector<8x8x32xf32>
    %38 = arith.mulf %34, %37 : vector<8x8x32xf32>
    %39 = tpu.iota {dimensions = array<i32: 0>} : vector<8x8xi32>
    %40 = tpu.iota {dimensions = array<i32: 1>} : vector<8x8xi32>
    %41 = arith.cmpi eq, %39, %40 : vector<8x8xi32>
    %42 = arith.extui %41 : vector<8x8xi1> to vector<8x8xi32>
    %43 = arith.sitofp %42 : vector<8x8xi32> to vector<8x8xf32>
    %44 = vector.shape_cast %43 : vector<8x8xf32> to vector<8x8x1xf32>
    %45 = vector.shape_cast %5 : vector<8x32xf32> to vector<1x8x32xf32>
    %46 = vector.broadcast %44 : vector<8x8x1xf32> to vector<8x8x32xf32>
    %47 = vector.broadcast %45 : vector<1x8x32xf32> to vector<8x8x32xf32>
    %48 = arith.mulf %46, %47 : vector<8x8x32xf32>
    %cst_22 = arith.constant 1.000000e+00 : f32
    %49 = vector.broadcast %cst_22 : f32 to vector<8x8x1xf32>
    %50 = arith.subf %49, %44 : vector<8x8x1xf32>
    %51 = vector.broadcast %50 : vector<8x8x1xf32> to vector<8x8x32xf32>
    %52 = arith.mulf %51, %38 : vector<8x8x32xf32>
    %53 = arith.addf %48, %52 : vector<8x8x32xf32>
    %c0_23 = arith.constant 0 : index
    %c0_24 = arith.constant 0 : index
    %54 = vector.load %arg10[%c0_23, %c0_24] : memref<32x4xf32, #tpu.memory_space<vmem>>, vector<32x4xf32>
    %cst_25 = arith.constant dense<0.000000e+00> : vector<8x4xf32>
    %55 = tpu.matmul %3, %54, %cst_25 {dimension_numbers = #tpu.dot_dimension_numbers<[1], [0], [0], [1], [0, 0, 1, 1], [], []>} : vector<8x32xf32>, vector<32x4xf32>, vector<8x4xf32> -> vector<8x4xf32>
    %c0_26 = arith.constant 0 : index
    %c0_27 = arith.constant 0 : index
    %56 = vector.load %arg11[%c0_26, %c0_27] : memref<32x4xf32, #tpu.memory_space<vmem>>, vector<32x4xf32>
    %cst_28 = arith.constant dense<0.000000e+00> : vector<8x4xf32>
    %57 = tpu.matmul %3, %56, %cst_28 {dimension_numbers = #tpu.dot_dimension_numbers<[1], [0], [0], [1], [0, 0, 1, 1], [], []>} : vector<8x32xf32>, vector<32x4xf32>, vector<8x4xf32> -> vector<8x4xf32>
    %58 = arith.addf %55, %57 : vector<8x4xf32>
    %59 = vector.shape_cast %55 : vector<8x4xf32> to vector<8x1x4xf32>
    %60 = vector.shape_cast %53 : vector<8x8x32xf32> to vector<64x32xf32>
    %c0_29 = arith.constant 0 : index
    %c0_30 = arith.constant 0 : index
    %61 = vector.load %arg11[%c0_29, %c0_30] : memref<32x4xf32, #tpu.memory_space<vmem>>, vector<32x4xf32>
    %cst_31 = arith.constant dense<0.000000e+00> : vector<64x4xf32>
    %62 = tpu.matmul %60, %61, %cst_31 {dimension_numbers = #tpu.dot_dimension_numbers<[1], [0], [0], [1], [0, 0, 1, 1], [], []>} : vector<64x32xf32>, vector<32x4xf32>, vector<64x4xf32> -> vector<64x4xf32>
    %63 = vector.shape_cast %62 : vector<64x4xf32> to vector<8x8x4xf32>
    %64 = vector.broadcast %59 : vector<8x1x4xf32> to vector<8x8x4xf32>
    %65 = arith.addf %64, %63 : vector<8x8x4xf32>
    %cst_32 = arith.constant 0.000000e+00 : f32
    %66 = vector.broadcast %cst_32 : f32 to vector<8x4xf32>
    %67 = arith.cmpf ogt, %58, %66 : vector<8x4xf32>
    %cst_33 = arith.constant 2.000000e-01 : f32
    %68 = vector.broadcast %cst_33 : f32 to vector<8x4xf32>
    %69 = arith.mulf %68, %58 : vector<8x4xf32>
    %70 = arith.select %67, %58, %69 : vector<8x4xi1>, vector<8x4xf32>
    %cst_34 = arith.constant 0.000000e+00 : f32
    %71 = vector.broadcast %cst_34 : f32 to vector<8x8x4xf32>
    %72 = arith.cmpf ogt, %65, %71 : vector<8x8x4xf32>
    %cst_35 = arith.constant 2.000000e-01 : f32
    %73 = vector.broadcast %cst_35 : f32 to vector<8x8x4xf32>
    %74 = arith.mulf %73, %65 : vector<8x8x4xf32>
    %75 = arith.select %72, %65, %74 : vector<8x8x4xi1>, vector<8x8x4xf32>
    %76 = tpu.iota {dimensions = array<i32: 1>} : vector<8x8xi32>
    %77 = vector.shape_cast %76 : vector<8x8xi32> to vector<8x8x1xi32>
    %78 = vector.broadcast %1 : i32 to vector<8x8x1xi32>
    %79 = arith.cmpi slt, %77, %78 : vector<8x8x1xi32>
    %cst_36 = arith.constant -1.000000e+30 : f32
    %80 = vector.shape_cast %79 : vector<8x8x1xi1> to vector<8x8x1xi1>
    %81 = vector.broadcast %80 : vector<8x8x1xi1> to vector<8x8x4xi1>
    %82 = vector.broadcast %cst_36 : f32 to vector<8x8x4xf32>
    %83 = arith.select %81, %75, %82 : vector<8x8x4xi1>, vector<8x8x4xf32>
    %cst_37 = arith.constant dense<0xFF800000> : vector<8x4xf32>
    %84 = vector.multi_reduction <maximumf>, %83, %cst_37 [1] : vector<8x8x4xf32> to vector<8x4xf32>
    %85 = arith.maximumf %70, %84 : vector<8x4xf32>
    %86 = arith.subf %70, %85 : vector<8x4xf32>
    %87 = math.exp %86 : vector<8x4xf32>
    %88 = vector.shape_cast %85 : vector<8x4xf32> to vector<8x1x4xf32>
    %89 = vector.broadcast %88 : vector<8x1x4xf32> to vector<8x8x4xf32>
    %90 = arith.subf %83, %89 : vector<8x8x4xf32>
    %91 = math.exp %90 : vector<8x8x4xf32>
    %cst_38 = arith.constant dense<0.000000e+00> : vector<8x4xf32>
    %92 = vector.multi_reduction <add>, %91, %cst_38 [1] : vector<8x8x4xf32> to vector<8x4xf32>
    %93 = arith.addf %87, %92 : vector<8x4xf32>
    %94 = tpu.reciprocal %93 {approx = true} : vector<8x4xf32> -> vector<8x4xf32>
    %95 = arith.mulf %87, %94 : vector<8x4xf32>
    %96 = vector.shape_cast %94 : vector<8x4xf32> to vector<8x1x4xf32>
    %97 = vector.broadcast %96 : vector<8x1x4xf32> to vector<8x8x4xf32>
    %98 = arith.mulf %91, %97 : vector<8x8x4xf32>
    %99 = vector.extract_strided_slice %95 {offsets = [0, 0], sizes = [8, 1], strides = [1, 1]} : vector<8x4xf32> to vector<8x1xf32>
    %100 = vector.broadcast %99 : vector<8x1xf32> to vector<8x32xf32>
    %101 = arith.mulf %100, %3 : vector<8x32xf32>
    %102 = vector.extract_strided_slice %98 {offsets = [0, 0, 0], sizes = [8, 8, 1], strides = [1, 1, 1]} : vector<8x8x4xf32> to vector<8x8x1xf32>
    %103 = vector.broadcast %102 : vector<8x8x1xf32> to vector<8x8x32xf32>
    %104 = arith.mulf %103, %53 : vector<8x8x32xf32>
    %cst_39 = arith.constant dense<0.000000e+00> : vector<8x32xf32>
    %105 = vector.multi_reduction <add>, %104, %cst_39 [1] : vector<8x8x32xf32> to vector<8x32xf32>
    %106 = arith.addf %101, %105 : vector<8x32xf32>
    %107 = vector.extract_strided_slice %95 {offsets = [0, 1], sizes = [8, 1], strides = [1, 1]} : vector<8x4xf32> to vector<8x1xf32>
    %108 = vector.broadcast %107 : vector<8x1xf32> to vector<8x32xf32>
    %109 = arith.mulf %108, %3 : vector<8x32xf32>
    %110 = vector.extract_strided_slice %98 {offsets = [0, 0, 1], sizes = [8, 8, 1], strides = [1, 1, 1]} : vector<8x8x4xf32> to vector<8x8x1xf32>
    %111 = vector.broadcast %110 : vector<8x8x1xf32> to vector<8x8x32xf32>
    %112 = arith.mulf %111, %53 : vector<8x8x32xf32>
    %cst_40 = arith.constant dense<0.000000e+00> : vector<8x32xf32>
    %113 = vector.multi_reduction <add>, %112, %cst_40 [1] : vector<8x8x32xf32> to vector<8x32xf32>
    %114 = arith.addf %109, %113 : vector<8x32xf32>
    %115 = vector.extract_strided_slice %95 {offsets = [0, 2], sizes = [8, 1], strides = [1, 1]} : vector<8x4xf32> to vector<8x1xf32>
    %116 = vector.broadcast %115 : vector<8x1xf32> to vector<8x32xf32>
    %117 = arith.mulf %116, %3 : vector<8x32xf32>
    %118 = vector.extract_strided_slice %98 {offsets = [0, 0, 2], sizes = [8, 8, 1], strides = [1, 1, 1]} : vector<8x8x4xf32> to vector<8x8x1xf32>
    %119 = vector.broadcast %118 : vector<8x8x1xf32> to vector<8x8x32xf32>
    %120 = arith.mulf %119, %53 : vector<8x8x32xf32>
    %cst_41 = arith.constant dense<0.000000e+00> : vector<8x32xf32>
    %121 = vector.multi_reduction <add>, %120, %cst_41 [1] : vector<8x8x32xf32> to vector<8x32xf32>
    %122 = arith.addf %117, %121 : vector<8x32xf32>
    %123 = vector.extract_strided_slice %95 {offsets = [0, 3], sizes = [8, 1], strides = [1, 1]} : vector<8x4xf32> to vector<8x1xf32>
    %124 = vector.broadcast %123 : vector<8x1xf32> to vector<8x32xf32>
    %125 = arith.mulf %124, %3 : vector<8x32xf32>
    %126 = vector.extract_strided_slice %98 {offsets = [0, 0, 3], sizes = [8, 8, 1], strides = [1, 1, 1]} : vector<8x8x4xf32> to vector<8x8x1xf32>
    %127 = vector.broadcast %126 : vector<8x8x1xf32> to vector<8x8x32xf32>
    %128 = arith.mulf %127, %53 : vector<8x8x32xf32>
    %cst_42 = arith.constant dense<0.000000e+00> : vector<8x32xf32>
    %129 = vector.multi_reduction <add>, %128, %cst_42 [1] : vector<8x8x32xf32> to vector<8x32xf32>
    %130 = arith.addf %125, %129 : vector<8x32xf32>
    %131 = tpu.concatenate %106, %114, %122, %130 in 1 : vector<8x32xf32>, vector<8x32xf32>, vector<8x32xf32>, vector<8x32xf32> -> vector<8x128xf32>
    %c0_43 = arith.constant 0 : index
    %c0_44 = arith.constant 0 : index
    %132 = vector.load %arg12[%c0_43, %c0_44] : memref<128x128xf32, #tpu.memory_space<vmem>>, vector<128x128xf32>
    %cst_45 = arith.constant dense<0.000000e+00> : vector<8x128xf32>
    %133 = tpu.matmul %131, %132, %cst_45 {dimension_numbers = #tpu.dot_dimension_numbers<[1], [0], [0], [1], [0, 0, 1, 1], [], []>} : vector<8x128xf32>, vector<128x128xf32>, vector<8x128xf32> -> vector<8x128xf32>
    %cst_46 = arith.constant 2.500000e-01 : f32
    %134 = vector.broadcast %cst_46 : f32 to vector<8x128xf32>
    %135 = arith.mulf %133, %134 : vector<8x128xf32>
    %cst_47 = arith.constant 0.000000e+00 : f32
    %136 = vector.broadcast %cst_47 : f32 to vector<8x128xf32>
    %137 = arith.maximumf %135, %136 : vector<8x128xf32>
    %c0_48 = arith.constant 0 : index
    %c0_49 = arith.constant 0 : index
    %138 = vector.load %arg13[%c0_48, %c0_49] : memref<1x128xf32, #tpu.memory_space<vmem>>, vector<1x128xf32>
    %139 = vector.broadcast %138 : vector<1x128xf32> to vector<8x128xf32>
    %140 = arith.addf %137, %139 : vector<8x128xf32>
    %c0_50 = arith.constant 0 : index
    %c0_51 = arith.constant 0 : index
    %c0_52 = arith.constant 0 : index
    %141 = vector.load %arg14[%c0_50, %c0_51, %c0_52] : memref<1x8x128xf32, #tpu.memory_space<vmem>>, vector<1x8x128xf32>
    %142 = vector.shape_cast %141 : vector<1x8x128xf32> to vector<8x128xf32>
    %143 = vector.shape_cast %140 : vector<8x128xf32> to vector<1x8x128xf32>
    tpu.vector_store %arg14[%c0_50, %c0_51, %c0_52], %143 {strides = array<i32>} : memref<1x8x128xf32, #tpu.memory_space<vmem>>, vector<1x8x128xf32>,
    return
  }
  func.func @transform_0(%arg0: i32, %arg1: memref<2xi32, #tpu.memory_space<smem>>) -> (i32, i32, i32) {
    %c0_i32 = arith.constant 0 : i32
    %c0_i32_0 = arith.constant 0 : i32
    %c0_i32_1 = arith.constant 0 : i32
    return %arg0, %c0_i32, %c0_i32_0 : i32, i32, i32
  }
  func.func @transform_1(%arg0: i32, %arg1: memref<2xi32, #tpu.memory_space<smem>>) -> (i32, i32, i32) {
    %c0_i32 = arith.constant 0 : i32
    %c0_i32_0 = arith.constant 0 : i32
    %c0_i32_1 = arith.constant 0 : i32
    return %arg0, %c0_i32, %c0_i32_0 : i32, i32, i32
  }
  func.func @transform_2(%arg0: i32, %arg1: memref<2xi32, #tpu.memory_space<smem>>) -> (i32, i32, i32) {
    %c0_i32 = arith.constant 0 : i32
    %c0_i32_0 = arith.constant 0 : i32
    %c0_i32_1 = arith.constant 0 : i32
    return %arg0, %c0_i32, %c0_i32_0 : i32, i32, i32
  }
  func.func @transform_3(%arg0: i32, %arg1: memref<2xi32, #tpu.memory_space<smem>>) -> (i32, i32) {
    %c0_i32 = arith.constant 0 : i32
    %c0_i32_0 = arith.constant 0 : i32
    %c0_i32_1 = arith.constant 0 : i32
    return %c0_i32, %c0_i32_0 : i32, i32
  }
  func.func @transform_4(%arg0: i32, %arg1: memref<2xi32, #tpu.memory_space<smem>>) -> (i32, i32) {
    %c0_i32 = arith.constant 0 : i32
    %c0_i32_0 = arith.constant 0 : i32
    %c0_i32_1 = arith.constant 0 : i32
    return %c0_i32, %c0_i32_0 : i32, i32
  }
  func.func @transform_5(%arg0: i32, %arg1: memref<2xi32, #tpu.memory_space<smem>>) -> (i32, i32) {
    %c0_i32 = arith.constant 0 : i32
    %c0_i32_0 = arith.constant 0 : i32
    %c0_i32_1 = arith.constant 0 : i32
    return %c0_i32, %c0_i32_0 : i32, i32
  }
  func.func @transform_6(%arg0: i32, %arg1: memref<2xi32, #tpu.memory_space<smem>>) -> (i32, i32) {
    %c0_i32 = arith.constant 0 : i32
    %c0_i32_0 = arith.constant 0 : i32
    %c0_i32_1 = arith.constant 0 : i32
    return %c0_i32, %c0_i32_0 : i32, i32
  }
  func.func @transform_7(%arg0: i32, %arg1: memref<2xi32, #tpu.memory_space<smem>>) -> (i32, i32) {
    %c0_i32 = arith.constant 0 : i32
    %c0_i32_0 = arith.constant 0 : i32
    %c0_i32_1 = arith.constant 0 : i32
    return %c0_i32, %c0_i32_0 : i32, i32
  }
  func.func @transform_8(%arg0: i32, %arg1: memref<2xi32, #tpu.memory_space<smem>>) -> (i32, i32) {
    %c0_i32 = arith.constant 0 : i32
    %c0_i32_0 = arith.constant 0 : i32
    %c0_i32_1 = arith.constant 0 : i32
    return %c0_i32, %c0_i32_0 : i32, i32
  }
  func.func @transform_9(%arg0: i32, %arg1: memref<2xi32, #tpu.memory_space<smem>>) -> (i32, i32) {
    %c0_i32 = arith.constant 0 : i32
    %c0_i32_0 = arith.constant 0 : i32
    %c0_i32_1 = arith.constant 0 : i32
    return %c0_i32, %c0_i32_0 : i32, i32
  }
  func.func @transform_10(%arg0: i32, %arg1: memref<2xi32, #tpu.memory_space<smem>>) -> (i32, i32) {
    %c0_i32 = arith.constant 0 : i32
    %c0_i32_0 = arith.constant 0 : i32
    %c0_i32_1 = arith.constant 0 : i32
    return %c0_i32, %c0_i32_0 : i32, i32
  }
  func.func @transform_11(%arg0: i32, %arg1: memref<2xi32, #tpu.memory_space<smem>>) -> (i32, i32) {
    %c0_i32 = arith.constant 0 : i32
    %c0_i32_0 = arith.constant 0 : i32
    %c0_i32_1 = arith.constant 0 : i32
    return %c0_i32, %c0_i32_0 : i32, i32
  }
  func.func @transform_12(%arg0: i32, %arg1: memref<2xi32, #tpu.memory_space<smem>>) -> (i32, i32, i32) {
    %c0_i32 = arith.constant 0 : i32
    %c0_i32_0 = arith.constant 0 : i32
    %c0_i32_1 = arith.constant 0 : i32
    return %arg0, %c0_i32, %c0_i32_0 : i32, i32, i32
  }
}

</mosaic_0001>

<llo_original>
// kernel: tpu_custom_call.1
$region0: #{tpu_custom_call.1}
  #allocation0 [shape = 'u32[]', space=smem, size = 0x4, offset = 0x4, fixed_abs, tag = 'smem constant byte address 0x4 - core index']
  #allocation1 [shape = 'u32[144,128]{1,0:T(1,128)}', space=vmem, size = 0x12000, scoped, tag = 'internal scratch']
  #allocation2 [shape = 's32[1]{0}', space=sflag, size = 0x4, scoped, tag = 'scoped memory for tpu_custom_call.1']
  #allocation3 [shape = 'u8[512]{0}', space=smem, size = 0x200, scoped, tag = 'prefetched SMEM operand 0']
  %s0 = inlined_call_operand.vmem [shape: s32[2], index: 0, kind: input, shape index: {}]
  %s1 = inlined_call_operand.hbm [shape: f32[2,8,32], index: 1, kind: input, shape index: {}]
  %s2 = inlined_call_operand.hbm [shape: f32[2,8,32], index: 2, kind: input, shape index: {}]
  %s3 = inlined_call_operand.vmem [shape: f32[2,8,4], index: 3, kind: input, shape index: {}]
  %s4 = inlined_call_operand.vmem [shape: f32[4,16], index: 4, kind: input, shape index: {}]
  %s5 = inlined_call_operand.vmem [shape: f32[4,16], index: 5, kind: input, shape index: {}]
  %s6 = inlined_call_operand.hbm [shape: f32[1,16], index: 6, kind: input, shape index: {}]
  %s7 = inlined_call_operand.hbm [shape: f32[16,32], index: 7, kind: input, shape index: {}]
  %s8 = inlined_call_operand.hbm [shape: f32[1,32], index: 8, kind: input, shape index: {}]
  %s9 = inlined_call_operand.vmem [shape: f32[32,4], index: 9, kind: input, shape index: {}]
  %s10 = inlined_call_operand.vmem [shape: f32[32,4], index: 10, kind: input, shape index: {}]
  %s11 = inlined_call_operand.vmem [shape: f32[128,128], index: 11, kind: input, shape index: {}]
  %s12 = inlined_call_operand.vmem [shape: f32[1,128], index: 12, kind: input, shape index: {}]
  %s13 = inlined_call_operand.hbm [shape: f32[2,8,128], index: 13, kind: output, shape index: {}]
  %s14 = sld [smem:[#allocation0]]
  $region101: #{tpu_custom_call.1} parent=0
    _
  %s16 = ssub.s32 1, %s14
  %s17 = scalar_select 0, %s16, %s14
  %s18 = sshll.u32 %s0, 4
  %s19 = int_to_ptr.vmem [resolvable:$true] %s18
  %21 = dma.vmem_to_smem %s19, 16, [#allocation3], [#allocation2]
  %22 = dma.done [#allocation2], 16
  %23 = sfence
  $region1: #{tpu_custom_call.1} parent=0
    #allocation4 [shape = 'u8[8192]{0}', space=vmem, size = 0x2000, scoped, tag = 'input window, operand 1']
    #allocation5 [shape = 's32[2]{0}', space=sflag, size = 0x8, scoped, tag = 'scoped memory for tpu_custom_call.1']
    #allocation6 [shape = 's32[2]{0}', space=sflag, size = 0x8, scoped, tag = 'scoped memory for tpu_custom_call.1']
    #allocation7 [shape = 'u8[8192]{0}', space=vmem, size = 0x2000, scoped, tag = 'input window, operand 2']
    #allocation8 [shape = 's32[2]{0}', space=sflag, size = 0x8, scoped, tag = 'scoped memory for tpu_custom_call.1']
    #allocation9 [shape = 'u8[512]{0}', space=vmem, size = 0x400, scoped, tag = 'input window, operand 6, single buffered']
    #allocation10 [shape = 'u8[8192]{0}', space=vmem, size = 0x2000, scoped, tag = 'input window, operand 7, single buffered']
    #allocation11 [shape = 's32[1]{0}', space=sflag, size = 0x4, scoped, tag = 'scoped memory for tpu_custom_call.1']
    #allocation12 [shape = 'u8[512]{0}', space=vmem, size = 0x400, scoped, tag = 'input window, operand 8, single buffered']
    #allocation13 [shape = 'u8[8192]{0}', space=vmem, size = 0x2000, scoped, tag = 'output window, operand 0']
    %24 = vsyncpa [#allocation5], 0
    %s25 = scalar_lea.sflag [#allocation5], 1
    %26 = vsyncpa %s25, 0
    %27 = vsyncpa [#allocation8], 0
    %s28 = scalar_lea.sflag [#allocation8], 1
    %29 = vsyncpa %s28, 0
    %30 = vsyncpa [#allocation11], 0
    %31 = vsyncpa [#allocation6], 0
    %s32 = scalar_lea.sflag [#allocation6], 1
    %33 = vsyncpa %s32, 0
    loop: start=0, step=1, limit=4
    $region2: #{tpu_custom_call.1} parent=1 // loop_pre_header
      _
    $region3: #{tpu_custom_call.1} parent=1 // loop_header
      %s35 = sphi 0, %s39
      %p36 = scmp.ge.s32.totalorder %s35, 4
      %s45 = sphi 0, %s47
      %s48 = sphi 0, %s45
      %s49 = sphi 0, %s48
      %s65 = sphi 0, %s49
      %s71 = sphi 0, %s73
      %s74 = sphi 0, %s71
      %s75 = sphi 0, %s74
      %s91 = sphi 0, %s75
      %s97 = sphi 0, %s99
      %s100 = sphi 0, %s97
      %s101 = sphi 0, %s100
      %s117 = sphi 0, %s101
      %s121 = sphi 0, %s121
      %s123 = sphi 0, %s121
      %s124 = sphi 0, %s123
      %s138 = sphi 0, %s124
      %s142 = sphi 0, %s142
      %s144 = sphi 0, %s142
      %s145 = sphi 0, %s144
      %s159 = sphi 0, %s145
      %s163 = sphi 0, %s163
      %s165 = sphi 0, %s163
      %s166 = sphi 0, %s165
      %s180 = sphi 0, %s166
      %s184 = sphi 0, %s184
      %s186 = sphi 0, %s184
      %s187 = sphi 0, %s186
      %s201 = sphi 0, %s187
      %s205 = sphi 0, %s205
      %s207 = sphi 0, %s205
      %s208 = sphi 0, %s207
      %s222 = sphi 0, %s208
      %s226 = sphi 0, %s226
      %s228 = sphi 0, %s226
      %s229 = sphi 0, %s228
      %s243 = sphi 0, %s229
      %s247 = sphi 0, %s247
      %s249 = sphi 0, %s247
      %s250 = sphi 0, %s249
      %s264 = sphi 0, %s250
      %s268 = sphi 0, %s268
      %s270 = sphi 0, %s268
      %s271 = sphi 0, %s270
      %s285 = sphi 0, %s271
      %s289 = sphi 0, %s289
      %s291 = sphi 0, %s289
      %s292 = sphi 0, %s291
      %s306 = sphi 0, %s292
      %s312 = sphi 0, %s314
      %s315 = sphi 0, %s312
      %s316 = sphi 0, %s315
      %s332 = sphi 0, %s316
    $region4: #{tpu_custom_call.1} parent=1 // loop_header_branch
      %38 = sbr.rel (%p36) target = $region8
    $region5: #{tpu_custom_call.1} parent=1 // loop_body
      %s40 = ssub.s32 %s35, 1
      %s41 = ssub.s32 %s35, 2
      %s42 = sadd.s32 %s35, 1
      %s43 = ssub.s32 %s35, %s42
      %p44 = scmp.eq.s32.totalorder %s43, 0
      %s46 = sadd.s32 %s45, 1
      %s47 = scalar_select %p44, %s45, %s46
      %p50 = pneg %p44
      %p51 = scmp.eq.s32.totalorder %s35, 1
      %p52 = por %p50, %p51
      %p53 = scmp.ne.s32.totalorder %s45, %s48
      %p54 = scmp.eq.s32.totalorder %s35, 0
      %p55 = por %p53, %p54
      %p56 = scmp.ne.s32.totalorder %s45, %s48
      %p57 = scmp.eq.s32.totalorder %s40, 1
      %p58 = por %p56, %p57
      %p59 = scmp.ne.s32.totalorder %s48, %s49
      %p60 = scmp.eq.s32.totalorder %s40, 0
      %p61 = por %p59, %p60
      %p62 = scmp.ne.s32.totalorder %s48, %s49
      %p63 = scmp.eq.s32.totalorder %s41, 1
      %p64 = por %p62, %p63
      %p66 = scmp.ne.s32.totalorder %s49, %s65
      %p67 = scmp.eq.s32.totalorder %s41, 0
      %p68 = por %p66, %p67
      %s69 = ssub.s32 %s35, %s42
      %p70 = scmp.eq.s32.totalorder %s69, 0
      %s72 = sadd.s32 %s71, 1
      %s73 = scalar_select %p70, %s71, %s72
      %p76 = pneg %p70
      %p77 = scmp.eq.s32.totalorder %s35, 1
      %p78 = por %p76, %p77
      %p79 = scmp.ne.s32.totalorder %s71, %s74
      %p80 = scmp.eq.s32.totalorder %s35, 0
      %p81 = por %p79, %p80
      %p82 = scmp.ne.s32.totalorder %s71, %s74
      %p83 = scmp.eq.s32.totalorder %s40, 1
      %p84 = por %p82, %p83
      %p85 = scmp.ne.s32.totalorder %s74, %s75
      %p86 = scmp.eq.s32.totalorder %s40, 0
      %p87 = por %p85, %p86
      %p88 = scmp.ne.s32.totalorder %s74, %s75
      %p89 = scmp.eq.s32.totalorder %s41, 1
      %p90 = por %p88, %p89
      %p92 = scmp.ne.s32.totalorder %s75, %s91
      %p93 = scmp.eq.s32.totalorder %s41, 0
      %p94 = por %p92, %p93
      %s95 = ssub.s32 %s35, %s42
      %p96 = scmp.eq.s32.totalorder %s95, 0
      %s98 = sadd.s32 %s97, 1
      %s99 = scalar_select %p96, %s97, %s98
      %p102 = pneg %p96
      %p103 = scmp.eq.s32.totalorder %s35, 1
      %p104 = por %p102, %p103
      %p105 = scmp.ne.s32.totalorder %s97, %s100
      %p106 = scmp.eq.s32.totalorder %s35, 0
      %p107 = por %p105, %p106
      %p108 = scmp.ne.s32.totalorder %s97, %s100
      %p109 = scmp.eq.s32.totalorder %s40, 1
      %p110 = por %p108, %p109
      %p111 = scmp.ne.s32.totalorder %s100, %s101
      %p112 = scmp.eq.s32.totalorder %s40, 0
      %p113 = por %p111, %p112
      %p114 = scmp.ne.s32.totalorder %s100, %s101
      %p115 = scmp.eq.s32.totalorder %s41, 1
      %p116 = por %p114, %p115
      %p118 = scmp.ne.s32.totalorder %s101, %s117
      %p119 = scmp.eq.s32.totalorder %s41, 0
      %p120 = por %p118, %p119
      %s122 = sadd.s32 %s121, 1
      %p125 = scmp.eq.s32.totalorder %s35, 1
      %p126 = scmp.ne.s32.totalorder %s121, %s123
      %p127 = scmp.eq.s32.totalorder %s35, 0
      %p128 = por %p126, %p127
      %p129 = scmp.ne.s32.totalorder %s121, %s123
      %p130 = scmp.eq.s32.totalorder %s40, 1
      %p131 = por %p129, %p130
      %p132 = scmp.ne.s32.totalorder %s123, %s124
      %p133 = scmp.eq.s32.totalorder %s40, 0
      %p134 = por %p132, %p133
      %p135 = scmp.ne.s32.totalorder %s123, %s124
      %p136 = scmp.eq.s32.totalorder %s41, 1
      %p137 = por %p135, %p136
      %p139 = scmp.ne.s32.totalorder %s124, %s138
      %p140 = scmp.eq.s32.totalorder %s41, 0
      %p141 = por %p139, %p140
      %s143 = sadd.s32 %s142, 1
      %p146 = scmp.eq.s32.totalorder %s35, 1
      %p147 = scmp.ne.s32.totalorder %s142, %s144
      %p148 = scmp.eq.s32.totalorder %s35, 0
      %p149 = por %p147, %p148
      %p150 = scmp.ne.s32.totalorder %s142, %s144
      %p151 = scmp.eq.s32.totalorder %s40, 1
      %p152 = por %p150, %p151
      %p153 = scmp.ne.s32.totalorder %s144, %s145
      %p154 = scmp.eq.s32.totalorder %s40, 0
      %p155 = por %p153, %p154
      %p156 = scmp.ne.s32.totalorder %s144, %s145
      %p157 = scmp.eq.s32.totalorder %s41, 1
      %p158 = por %p156, %p157
      %p160 = scmp.ne.s32.totalorder %s145, %s159
      %p161 = scmp.eq.s32.totalorder %s41, 0
      %p162 = por %p160, %p161
      %s164 = sadd.s32 %s163, 1
      %p167 = scmp.eq.s32.totalorder %s35, 1
      %p168 = scmp.ne.s32.totalorder %s163, %s165
      %p169 = scmp.eq.s32.totalorder %s35, 0
      %p170 = por %p168, %p169
      %p171 = scmp.ne.s32.totalorder %s163, %s165
      %p172 = scmp.eq.s32.totalorder %s40, 1
      %p173 = por %p171, %p172
      %p174 = scmp.ne.s32.totalorder %s165, %s166
      %p175 = scmp.eq.s32.totalorder %s40, 0
      %p176 = por %p174, %p175
      %p177 = scmp.ne.s32.totalorder %s165, %s166
      %p178 = scmp.eq.s32.totalorder %s41, 1
      %p179 = por %p177, %p178
      %p181 = scmp.ne.s32.totalorder %s166, %s180
      %p182 = scmp.eq.s32.totalorder %s41, 0
      %p183 = por %p181, %p182
      %s185 = sadd.s32 %s184, 1
      %p188 = scmp.eq.s32.totalorder %s35, 1
      %p189 = scmp.ne.s32.totalorder %s184, %s186
      %p190 = scmp.eq.s32.totalorder %s35, 0
      %p191 = por %p189, %p190
      %p192 = scmp.ne.s32.totalorder %s184, %s186
      %p193 = scmp.eq.s32.totalorder %s40, 1
      %p194 = por %p192, %p193
      %p195 = scmp.ne.s32.totalorder %s186, %s187
      %p196 = scmp.eq.s32.totalorder %s40, 0
      %p197 = por %p195, %p196
      %p198 = scmp.ne.s32.totalorder %s186, %s187
      %p199 = scmp.eq.s32.totalorder %s41, 1
      %p200 = por %p198, %p199
      %p202 = scmp.ne.s32.totalorder %s187, %s201
      %p203 = scmp.eq.s32.totalorder %s41, 0
      %p204 = por %p202, %p203
      %s206 = sadd.s32 %s205, 1
      %p209 = scmp.eq.s32.totalorder %s35, 1
      %p210 = scmp.ne.s32.totalorder %s205, %s207
      %p211 = scmp.eq.s32.totalorder %s35, 0
      %p212 = por %p210, %p211
      %p213 = scmp.ne.s32.totalorder %s205, %s207
      %p214 = scmp.eq.s32.totalorder %s40, 1
      %p215 = por %p213, %p214
      %p216 = scmp.ne.s32.totalorder %s207, %s208
      %p217 = scmp.eq.s32.totalorder %s40, 0
      %p218 = por %p216, %p217
      %p219 = scmp.ne.s32.totalorder %s207, %s208
      %p220 = scmp.eq.s32.totalorder %s41, 1
      %p221 = por %p219, %p220
      %p223 = scmp.ne.s32.totalorder %s208, %s222
      %p224 = scmp.eq.s32.totalorder %s41, 0
      %p225 = por %p223, %p224
      %s227 = sadd.s32 %s226, 1
      %p230 = scmp.eq.s32.totalorder %s35, 1
      %p231 = scmp.ne.s32.totalorder %s226, %s228
      %p232 = scmp.eq.s32.totalorder %s35, 0
      %p233 = por %p231, %p232
      %p234 = scmp.ne.s32.totalorder %s226, %s228
      %p235 = scmp.eq.s32.totalorder %s40, 1
      %p236 = por %p234, %p235
      %p237 = scmp.ne.s32.totalorder %s228, %s229
      %p238 = scmp.eq.s32.totalorder %s40, 0
      %p239 = por %p237, %p238
      %p240 = scmp.ne.s32.totalorder %s228, %s229
      %p241 = scmp.eq.s32.totalorder %s41, 1
      %p242 = por %p240, %p241
      %p244 = scmp.ne.s32.totalorder %s229, %s243
      %p245 = scmp.eq.s32.totalorder %s41, 0
      %p246 = por %p244, %p245
      %s248 = sadd.s32 %s247, 1
      %p251 = scmp.eq.s32.totalorder %s35, 1
      %p252 = scmp.ne.s32.totalorder %s247, %s249
      %p253 = scmp.eq.s32.totalorder %s35, 0
      %p254 = por %p252, %p253
      %p255 = scmp.ne.s32.totalorder %s247, %s249
      %p256 = scmp.eq.s32.totalorder %s40, 1
      %p257 = por %p255, %p256
      %p258 = scmp.ne.s32.totalorder %s249, %s250
      %p259 = scmp.eq.s32.totalorder %s40, 0
      %p260 = por %p258, %p259
      %p261 = scmp.ne.s32.totalorder %s249, %s250
      %p262 = scmp.eq.s32.totalorder %s41, 1
      %p263 = por %p261, %p262
      %p265 = scmp.ne.s32.totalorder %s250, %s264
      %p266 = scmp.eq.s32.totalorder %s41, 0
      %p267 = por %p265, %p266
      %s269 = sadd.s32 %s268, 1
      %p272 = scmp.eq.s32.totalorder %s35, 1
      %p273 = scmp.ne.s32.totalorder %s268, %s270
      %p274 = scmp.eq.s32.totalorder %s35, 0
      %p275 = por %p273, %p274
      %p276 = scmp.ne.s32.totalorder %s268, %s270
      %p277 = scmp.eq.s32.totalorder %s40, 1
      %p278 = por %p276, %p277
      %p279 = scmp.ne.s32.totalorder %s270, %s271
      %p280 = scmp.eq.s32.totalorder %s40, 0
      %p281 = por %p279, %p280
      %p282 = scmp.ne.s32.totalorder %s270, %s271
      %p283 = scmp.eq.s32.totalorder %s41, 1
      %p284 = por %p282, %p283
      %p286 = scmp.ne.s32.totalorder %s271, %s285
      %p287 = scmp.eq.s32.totalorder %s41, 0
      %p288 = por %p286, %p287
      %s290 = sadd.s32 %s289, 1
      %p293 = scmp.eq.s32.totalorder %s35, 1
      %p294 = scmp.ne.s32.totalorder %s289, %s291
      %p295 = scmp.eq.s32.totalorder %s35, 0
      %p296 = por %p294, %p295
      %p297 = scmp.ne.s32.totalorder %s289, %s291
      %p298 = scmp.eq.s32.totalorder %s40, 1
      %p299 = por %p297, %p298
      %p300 = scmp.ne.s32.totalorder %s291, %s292
      %p301 = scmp.eq.s32.totalorder %s40, 0
      %p302 = por %p300, %p301
      %p303 = scmp.ne.s32.totalorder %s291, %s292
      %p304 = scmp.eq.s32.totalorder %s41, 1
      %p305 = por %p303, %p304
      %p307 = scmp.ne.s32.totalorder %s292, %s306
      %p308 = scmp.eq.s32.totalorder %s41, 0
      %p309 = por %p307, %p308
      %s310 = ssub.s32 %s35, %s42
      %p311 = scmp.eq.s32.totalorder %s310, 0
      %s313 = sadd.s32 %s312, 1
      %s314 = scalar_select %p311, %s312, %s313
      %p317 = pneg %p311
      %p318 = scmp.eq.s32.totalorder %s35, 1
      %p319 = por %p317, %p318
      %p320 = scmp.ne.s32.totalorder %s312, %s315
      %p321 = scmp.eq.s32.totalorder %s35, 0
      %p322 = por %p320, %p321
      %p323 = scmp.ne.s32.totalorder %s312, %s315
      %p324 = scmp.eq.s32.totalorder %s40, 1
      %p325 = por %p323, %p324
      %p326 = scmp.ne.s32.totalorder %s315, %s316
      %p327 = scmp.eq.s32.totalorder %s40, 0
      %p328 = por %p326, %p327
      %p329 = scmp.ne.s32.totalorder %s315, %s316
      %p330 = scmp.eq.s32.totalorder %s41, 1
      %p331 = por %p329, %p330
      %p333 = scmp.ne.s32.totalorder %s316, %s332
      %p334 = scmp.eq.s32.totalorder %s41, 0
      %p335 = por %p333, %p334
      %p336 = scmp.le.s32.totalorder 1, %s35
      %p337 = scmp.lt.s32.totalorder %s35, 3
      %p338 = pnand %p336, %p337
      %p339 = pneg %p338
      // Predicated region
      $region9: #{tpu_custom_call.1} parent=5 // pred_check
        _
      $region10: #{tpu_custom_call.1} parent=5 // pred_check_branch
        %341 = sbr.rel (%p338) target = $region12
      $region11: #{tpu_custom_call.1} parent=5 // pred_region
        %s342 = ssub.s32 %s35, 1
        // Predicated region
        $region13: #{tpu_custom_call.1} parent=11 // pred_check
          %p343 = pneg %p134
        $region14: #{tpu_custom_call.1} parent=11 // pred_check_branch
          %345 = sbr.rel (%p343) target = $region16
        $region15: #{tpu_custom_call.1} parent=11 // pred_region
          _
        $region16: #{tpu_custom_call.1} parent=11 // pred_fallthru
          _
        // Predicated region
        $region17: #{tpu_custom_call.1} parent=11 // pred_check
          %p346 = pneg %p155
        $region18: #{tpu_custom_call.1} parent=11 // pred_check_branch
          %348 = sbr.rel (%p346) target = $region20
        $region19: #{tpu_custom_call.1} parent=11 // pred_region
          _
        $region20: #{tpu_custom_call.1} parent=11 // pred_fallthru
          _
        // Predicated region
        $region21: #{tpu_custom_call.1} parent=11 // pred_check
          %p349 = pneg %p176
        $region22: #{tpu_custom_call.1} parent=11 // pred_check_branch
          %351 = sbr.rel (%p349) target = $region24
        $region23: #{tpu_custom_call.1} parent=11 // pred_region
          %s353 = ssub.s32 16, 16
          %354 = vsyncadd [#allocation8], %s353
          %s356 = sshll.u32 [#allocation9], 4
          %s357 = int_to_ptr.vmem [resolvable:$true] %s356
          %359 = dma.hbm_to_vmem [thread:$0]  %s6, 16, %s357, [#allocation8]
        $region24: #{tpu_custom_call.1} parent=11 // pred_fallthru
          _
        // Predicated region
        $region25: #{tpu_custom_call.1} parent=11 // pred_check
          %p360 = pneg %p197
        $region26: #{tpu_custom_call.1} parent=11 // pred_check_branch
          %362 = sbr.rel (%p360) target = $region28
        $region27: #{tpu_custom_call.1} parent=11 // pred_region
          %s364 = ssub.s32 256, 256
          %365 = vsyncadd [#allocation11], %s364
          %s366 = sshll.u32 [#allocation10], 4
          %s367 = int_to_ptr.vmem [resolvable:$true] %s366
          %372 = dma.hbm_to_vmem [thread:$0]  %s7, 256, %s367, [#allocation11], 128, 128, 8
        $region28: #{tpu_custom_call.1} parent=11 // pred_fallthru
          _
        // Predicated region
        $region29: #{tpu_custom_call.1} parent=11 // pred_check
          %p373 = pneg %p218
        $region30: #{tpu_custom_call.1} parent=11 // pred_check_branch
          %375 = sbr.rel (%p373) target = $region32
        $region31: #{tpu_custom_call.1} parent=11 // pred_region
          %s377 = ssub.s32 16, 16
          %378 = vsyncadd [#allocation11], %s377
          %s380 = sshll.u32 [#allocation12], 4
          %s381 = int_to_ptr.vmem [resolvable:$true] %s380
          %383 = dma.hbm_to_vmem [thread:$0]  %s8, 16, %s381, [#allocation11]
        $region32: #{tpu_custom_call.1} parent=11 // pred_fallthru
          _
        // Predicated region
        $region33: #{tpu_custom_call.1} parent=11 // pred_check
          %p384 = pneg %p239
        $region34: #{tpu_custom_call.1} parent=11 // pred_check_branch
          %386 = sbr.rel (%p384) target = $region36
        $region35: #{tpu_custom_call.1} parent=11 // pred_region
          _
        $region36: #{tpu_custom_call.1} parent=11 // pred_fallthru
          _
        // Predicated region
        $region37: #{tpu_custom_call.1} parent=11 // pred_check
          %p387 = pneg %p260
        $region38: #{tpu_custom_call.1} parent=11 // pred_check_branch
          %389 = sbr.rel (%p387) target = $region40
        $region39: #{tpu_custom_call.1} parent=11 // pred_region
          _
        $region40: #{tpu_custom_call.1} parent=11 // pred_fallthru
          _
        // Predicated region
        $region41: #{tpu_custom_call.1} parent=11 // pred_check
          %p390 = pneg %p281
        $region42: #{tpu_custom_call.1} parent=11 // pred_check_branch
          %392 = sbr.rel (%p390) target = $region44
        $region43: #{tpu_custom_call.1} parent=11 // pred_region
          _
        $region44: #{tpu_custom_call.1} parent=11 // pred_fallthru
          _
        // Predicated region
        $region45: #{tpu_custom_call.1} parent=11 // pred_check
          %p393 = pneg %p302
        $region46: #{tpu_custom_call.1} parent=11 // pred_check_branch
          %395 = sbr.rel (%p393) target = $region48
        $region47: #{tpu_custom_call.1} parent=11 // pred_region
          _
        $region48: #{tpu_custom_call.1} parent=11 // pred_fallthru
          _
      $region12: #{tpu_custom_call.1} parent=5 // pred_fallthru
        _
      %p396 = scmp.lt.s32.totalorder %s35, 2
      // Predicated region
      $region49: #{tpu_custom_call.1} parent=5 // pred_check
        %p397 = pneg %p396
      $region50: #{tpu_custom_call.1} parent=5 // pred_check_branch
        %399 = sbr.rel (%p397) target = $region52
      $region51: #{tpu_custom_call.1} parent=5 // pred_region
        // Predicated region
        $region53: #{tpu_custom_call.1} parent=51 // pred_check
          %p400 = pneg %p55
        $region54: #{tpu_custom_call.1} parent=51 // pred_check_branch
          %402 = sbr.rel (%p400) target = $region56
        $region55: #{tpu_custom_call.1} parent=51 // pred_region
          %s403 = sand.u32 %s45, 1
          %s404 = scalar_lea.sflag [#allocation5], %s403
          %s405 = sand.u32 %s45, 1
          %s406 = smul.addr %s405, 8
          %s407 = scalar_lea.vmem [#allocation4], %s406
          %s409 = ssub.s32 128, 128
          %410 = vsyncadd %s404, %s409
          %s411 = smul.addr %s35, 128
          %s412 = scalar_lea.hbm %s1, %s411
          %s414 = sshll.u32 %s407, 4
          %s415 = int_to_ptr.vmem [resolvable:$true] %s414
          %417 = dma.hbm_to_vmem [thread:$0]  %s412, 128, %s415, %s404
        $region56: #{tpu_custom_call.1} parent=51 // pred_fallthru
          _
        // Predicated region
        $region57: #{tpu_custom_call.1} parent=51 // pred_check
          %p418 = pneg %p81
        $region58: #{tpu_custom_call.1} parent=51 // pred_check_branch
          %420 = sbr.rel (%p418) target = $region60
        $region59: #{tpu_custom_call.1} parent=51 // pred_region
          %s421 = sand.u32 %s35, 1
          %s422 = scalar_lea.sflag [#allocation8], %s421
          %s423 = sand.u32 %s71, 1
          %s424 = smul.addr %s423, 8
          %s425 = scalar_lea.vmem [#allocation7], %s424
          %s427 = ssub.s32 128, 128
          %428 = vsyncadd %s422, %s427
          %s429 = smul.addr %s35, 128
          %s430 = scalar_lea.hbm %s2, %s429
          %s432 = sshll.u32 %s425, 4
          %s433 = int_to_ptr.vmem [resolvable:$true] %s432
          %435 = dma.hbm_to_vmem [thread:$0]  %s430, 128, %s433, %s422
        $region60: #{tpu_custom_call.1} parent=51 // pred_fallthru
          _
        // Predicated region
        $region61: #{tpu_custom_call.1} parent=51 // pred_check
          %p436 = pneg %p107
        $region62: #{tpu_custom_call.1} parent=51 // pred_check_branch
          %438 = sbr.rel (%p436) target = $region64
        $region63: #{tpu_custom_call.1} parent=51 // pred_region
          %p439 = scmp.lt.s32.totalorder %s35, 1
          %s440 = scalar_select %p439, %s35, 1
          %s441 = smul.addr %s440, 8
          %s442 = scalar_lea.vmem %s3, %s441
        $region64: #{tpu_custom_call.1} parent=51 // pred_fallthru
          _
      $region52: #{tpu_custom_call.1} parent=5 // pred_fallthru
        _
      %p443 = scmp.le.s32.totalorder 1, %s35
      %p444 = scmp.lt.s32.totalorder %s35, 3
      %p445 = pnand %p443, %p444
      %p446 = pneg %p445
      // Predicated region
      $region65: #{tpu_custom_call.1} parent=5 // pred_check
        _
      $region66: #{tpu_custom_call.1} parent=5 // pred_check_branch
        %448 = sbr.rel (%p445) target = $region68
      $region67: #{tpu_custom_call.1} parent=5 // pred_region
        %s449 = ssub.s32 %s35, 1
        %s450 = sand.u32 %s48, 1
        %s451 = scalar_lea.sflag [#allocation5], %s450
        %s452 = sand.u32 %s48, 1
        %s453 = smul.addr %s452, 8
        %s454 = scalar_lea.vmem [#allocation4], %s453
        // Predicated region
        $region69: #{tpu_custom_call.1} parent=67 // pred_check
          %p455 = pneg %p61
        $region70: #{tpu_custom_call.1} parent=67 // pred_check_branch
          %457 = sbr.rel (%p455) target = $region72
        $region71: #{tpu_custom_call.1} parent=67 // pred_region
          %458 = dma.done %s451, 128
        $region72: #{tpu_custom_call.1} parent=67 // pred_fallthru
          _
        %s459 = sand.u32 %s40, 1
        %s460 = scalar_lea.sflag [#allocation8], %s459
        %s461 = sand.u32 %s74, 1
        %s462 = smul.addr %s461, 8
        %s463 = scalar_lea.vmem [#allocation7], %s462
        // Predicated region
        $region73: #{tpu_custom_call.1} parent=67 // pred_check
          %p464 = pneg %p87
        $region74: #{tpu_custom_call.1} parent=67 // pred_check_branch
          %466 = sbr.rel (%p464) target = $region76
        $region75: #{tpu_custom_call.1} parent=67 // pred_region
          %467 = dma.done %s460, 128
        $region76: #{tpu_custom_call.1} parent=67 // pred_fallthru
          _
        // Predicated region
        $region77: #{tpu_custom_call.1} parent=67 // pred_check
          %p468 = pneg %p176
        $region78: #{tpu_custom_call.1} parent=67 // pred_check_branch
          %470 = sbr.rel (%p468) target = $region80
        $region79: #{tpu_custom_call.1} parent=67 // pred_region
          %471 = dma.done [#allocation8], 16
        $region80: #{tpu_custom_call.1} parent=67 // pred_fallthru
          _
        // Predicated region
        $region81: #{tpu_custom_call.1} parent=67 // pred_check
          %p472 = pneg %p197
        $region82: #{tpu_custom_call.1} parent=67 // pred_check_branch
          %474 = sbr.rel (%p472) target = $region84
        $region83: #{tpu_custom_call.1} parent=67 // pred_region
          %475 = dma.done [#allocation11], 256
        $region84: #{tpu_custom_call.1} parent=67 // pred_fallthru
          _
        // Predicated region
        $region85: #{tpu_custom_call.1} parent=67 // pred_check
          %p476 = pneg %p218
        $region86: #{tpu_custom_call.1} parent=67 // pred_check_branch
          %478 = sbr.rel (%p476) target = $region88
        $region87: #{tpu_custom_call.1} parent=67 // pred_region
          %479 = dma.done [#allocation11], 16
        $region88: #{tpu_custom_call.1} parent=67 // pred_fallthru
          _
        %s480 = sand.u32 %s48, 1
        %s481 = scalar_lea.sflag [#allocation5], %s480
        %s482 = sand.u32 %s48, 1
        %s483 = smul.addr %s482, 8
        %s484 = scalar_lea.vmem [#allocation4], %s483
        %p485 = pneg %p61
        %p486 = pneg %p58
        %s487 = sand.u32 %s40, 1
        %s488 = scalar_lea.sflag [#allocation8], %s487
        %s489 = sand.u32 %s74, 1
        %s490 = smul.addr %s489, 8
        %s491 = scalar_lea.vmem [#allocation7], %s490
        %p492 = pneg %p87
        %p493 = pneg %p84
        %p494 = scmp.lt.s32.totalorder %s40, 1
        %s495 = scalar_select %p494, %s40, 1
        %s496 = smul.addr %s495, 8
        %s497 = scalar_lea.vmem %s3, %s496
        %p498 = pneg %p113
        %p499 = pneg %p110
        %p500 = pneg %p134
        %p501 = pneg %p131
        %p502 = pneg %p155
        %p503 = pneg %p152
        %p504 = pneg %p176
        %p505 = pneg %p173
        %p506 = pneg %p197
        %p507 = pneg %p194
        %p508 = pneg %p218
        %p509 = pneg %p215
        %p510 = pneg %p239
        %p511 = pneg %p236
        %p512 = pneg %p260
        %p513 = pneg %p257
        %p514 = pneg %p281
        %p515 = pneg %p278
        %p516 = pneg %p302
        %p517 = pneg %p299
        %p518 = pneg %p328
        %p519 = pneg %p325
        %s520 = sand.u32 %s315, 1
        %s521 = scalar_lea.sflag [#allocation6], %s520
        %s522 = sand.u32 %s315, 1
        %s523 = smul.addr %s522, 8
        %s524 = scalar_lea.vmem [#allocation13], %s523
        %p525 = scmp.lt.s32.totalorder %s40, 1
        %s526 = scalar_select %p525, %s40, 1
        %s527 = smul.addr %s526, 8
        %s528 = scalar_lea.vmem %s3, %s527
        %s529 = sld [smem:[#allocation3 + %s40]]
        %v530 = vld [vmem:[%s454] sm:$0xff]
        %v531 = vld [vmem:[%s463] sm:$0xff]
        %v532 = vld [vmem:[%s528] sm:$0xff]
        %v533 = vld [vmem:[%s4] sm:$0xf]
        %vm534 = vcmask 31744
        %v536 = vsel %vm534, %v532, 0
        %vm538 = vcmask 1043456
        %v540 = vsel %vm538, %v533, 0
        %542 = vmatprep.subr.mxu0 0.0
        %543 = vmatpush1.msra.mxu0 %v540
        %544 = vmatprep.subr.mxu0 0.0
        %545 = vmatpush1.msra.mxu0 0.0
        %546 = vmatprep.subr.mxu0 0.0
        %547 = vmatpush1.msra.mxu0 0.0
        %548 = vmatprep.subr.mxu0 0.0
        %549 = vmatpush1.msra.mxu0 0.0
        %550 = vmatprep.subr.mxu0 0.0
        %551 = vmatpush1.msra.mxu0 0.0
        %552 = vmatprep.subr.mxu0 0.0
        %553 = vmatpush1.msra.mxu0 0.0
        %554 = vmatprep.subr.mxu0 0.0
        %555 = vmatpush1.msra.mxu0 0.0
        %556 = vmatprep.subr.mxu0 0.0
        %557 = vmatpush1.msra.mxu0 0.0
        %558 = vmatprep.subr.mxu0 0.0
        %559 = vmatpush1.msra.mxu0 0.0
        %560 = vmatprep.subr.mxu0 0.0
        %561 = vmatpush1.msra.mxu0 0.0
        %562 = vmatprep.subr.mxu0 0.0
        %563 = vmatpush1.msra.mxu0 0.0
        %564 = vmatprep.subr.mxu0 0.0
        %565 = vmatpush1.msra.mxu0 0.0
        %566 = vmatprep.subr.mxu0 0.0
        %567 = vmatpush1.msra.mxu0 0.0
        %568 = vmatprep.subr.mxu0 0.0
        %569 = vmatpush1.msra.mxu0 0.0
        %570 = vmatprep.subr.mxu0 0.0
        %571 = vmatpush1.msra.mxu0 0.0
        %572 = vmatprep.subr.mxu0 0.0
        %573 = vmatpush1.msra.mxu0 0.0
        %574 = vmatprep.subr.mxu0 0.0
        %575 = vmatpush1.msra.mxu0 0.0
        %576 = vmatprep.subr.mxu0 0.0
        %577 = vmatpush1.msra.mxu0 0.0
        %578 = vmatprep.subr.mxu0 0.0
        %579 = vmatpush1.msra.mxu0 0.0
        %580 = vmatprep.subr.mxu0 0.0
        %581 = vmatpush1.msra.mxu0 0.0
        %582 = vmatprep.subr.mxu0 0.0
        %583 = vmatpush1.msra.mxu0 0.0
        %584 = vmatprep.subr.mxu0 0.0
        %585 = vmatpush1.msra.mxu0 0.0
        %586 = vmatprep.subr.mxu0 0.0
        %587 = vmatpush1.msra.mxu0 0.0
        %588 = vmatprep.subr.mxu0 0.0
        %589 = vmatpush1.msra.mxu0 0.0
        %590 = vmatprep.subr.mxu0 0.0
        %591 = vmatpush1.msra.mxu0 0.0
        %592 = vmatprep.subr.mxu0 0.0
        %593 = vmatpush1.msra.mxu0 0.0
        %594 = vmatprep.subr.mxu0 0.0
        %595 = vmatpush1.msra.mxu0 0.0
        %596 = vmatprep.subr.mxu0 0.0
        %597 = vmatpush1.msra.mxu0 0.0
        %598 = vmatprep.subr.mxu0 0.0
        %599 = vmatpush1.msra.mxu0 0.0
        %600 = vmatprep.subr.mxu0 0.0
        %601 = vmatpush1.msra.mxu0 0.0
        %602 = vmatprep.subr.mxu0 0.0
        %603 = vmatpush1.msra.mxu0 0.0
        %604 = vmatprep.subr.mxu0 0.0
        %605 = vmatpush1.msra.mxu0 0.0
        %606 = vmatprep.mubr.f32.mxu0 0.0
        %607 = vmatmul.mubr.f32.gmra.mrb[0].mxu0 %v536
        %v608 = vpop.f32.mrb[0].mxu0
        %v609 = vadd.f32 0.0, %v608
        %v610 = vpop.f32.mrb[0].mxu0
        %611 = vdwg.mxu0
        %v612 = vld [vmem:[%s5] sm:$0xf]
        %v614 = vsel %vm538, %v612, 0
        %616 = vmatprep.subr.mxu0 0.0
        %617 = vmatpush1.msra.mxu0 %v614
        %618 = vmatprep.subr.mxu0 0.0
        %619 = vmatpush1.msra.mxu0 0.0
        %620 = vmatprep.subr.mxu0 0.0
        %621 = vmatpush1.msra.mxu0 0.0
        %622 = vmatprep.subr.mxu0 0.0
        %623 = vmatpush1.msra.mxu0 0.0
        %624 = vmatprep.subr.mxu0 0.0
        %625 = vmatpush1.msra.mxu0 0.0
        %626 = vmatprep.subr.mxu0 0.0
        %627 = vmatpush1.msra.mxu0 0.0
        %628 = vmatprep.subr.mxu0 0.0
        %629 = vmatpush1.msra.mxu0 0.0
        %630 = vmatprep.subr.mxu0 0.0
        %631 = vmatpush1.msra.mxu0 0.0
        %632 = vmatprep.subr.mxu0 0.0
        %633 = vmatpush1.msra.mxu0 0.0
        %634 = vmatprep.subr.mxu0 0.0
        %635 = vmatpush1.msra.mxu0 0.0
        %636 = vmatprep.subr.mxu0 0.0
        %637 = vmatpush1.msra.mxu0 0.0
        %638 = vmatprep.subr.mxu0 0.0
        %639 = vmatpush1.msra.mxu0 0.0
        %640 = vmatprep.subr.mxu0 0.0
        %641 = vmatpush1.msra.mxu0 0.0
        %642 = vmatprep.subr.mxu0 0.0
        %643 = vmatpush1.msra.mxu0 0.0
        %644 = vmatprep.subr.mxu0 0.0
        %645 = vmatpush1.msra.mxu0 0.0
        %646 = vmatprep.subr.mxu0 0.0
        %647 = vmatpush1.msra.mxu0 0.0
        %648 = vmatprep.subr.mxu0 0.0
        %649 = vmatpush1.msra.mxu0 0.0
        %650 = vmatprep.subr.mxu0 0.0
        %651 = vmatpush1.msra.mxu0 0.0
        %652 = vmatprep.subr.mxu0 0.0
        %653 = vmatpush1.msra.mxu0 0.0
        %654 = vmatprep.subr.mxu0 0.0
        %655 = vmatpush1.msra.mxu0 0.0
        %656 = vmatprep.subr.mxu0 0.0
        %657 = vmatpush1.msra.mxu0 0.0
        %658 = vmatprep.subr.mxu0 0.0
        %659 = vmatpush1.msra.mxu0 0.0
        %660 = vmatprep.subr.mxu0 0.0
        %661 = vmatpush1.msra.mxu0 0.0
        %662 = vmatprep.subr.mxu0 0.0
        %663 = vmatpush1.msra.mxu0 0.0
        %664 = vmatprep.subr.mxu0 0.0
        %665 = vmatpush1.msra.mxu0 0.0
        %666 = vmatprep.subr.mxu0 0.0
        %667 = vmatpush1.msra.mxu0 0.0
        %668 = vmatprep.subr.mxu0 0.0
        %669 = vmatpush1.msra.mxu0 0.0
        %670 = vmatprep.subr.mxu0 0.0
        %671 = vmatpush1.msra.mxu0 0.0
        %672 = vmatprep.subr.mxu0 0.0
        %673 = vmatpush1.msra.mxu0 0.0
        %674 = vmatprep.subr.mxu0 0.0
        %675 = vmatpush1.msra.mxu0 0.0
        %676 = vmatprep.subr.mxu0 0.0
        %677 = vmatpush1.msra.mxu0 0.0
        %678 = vmatprep.subr.mxu0 0.0
        %679 = vmatpush1.msra.mxu0 0.0
        %680 = vmatprep.mubr.f32.mxu0 0.0
        %681 = vmatmul.mubr.f32.gmra.mrb[0].mxu0 %v536
        %v682 = vpop.f32.mrb[0].mxu0
        %v683 = vadd.f32 0.0, %v682
        %v684 = vpop.f32.mrb[0].mxu0
        %685 = vdwg.mxu0
        %v687 = vcombine.high %v609, %v609
        %v689 = vunpack.c.l.s4 1966171168
        %v690 = vunpack.c.0.s8 %v689
        %v691 = vlaneseq
        %v692 = vshrl.u32 %v691, 7
        %v693 = vsub.s32 %v690, %v692
        %v694 = vrot.slane %v609, %v693
        %v696 = vunpack.c.l.s4 1966171168
        %v697 = vunpack.c.0.s8 %v696
        %v698 = vlaneseq
        %v699 = vshrl.u32 %v698, 7
        %v700 = vsub.s32 %v697, %v699
        %v701 = vrot.slane %v687, %v700
        %v702 = vcombine.high %v694, %v694
        %v703 = vcombine.high %v701, %v701
        %v705 = vunpack.c.l.s4 1966171168
        %v706 = vunpack.c.0.s8 %v705
        %v707 = vlaneseq
        %v708 = vshrl.u32 %v707, 7
        %v709 = vsub.s32 %v706, %v708
        %v710 = vrot.slane %v694, %v709
        %v712 = vunpack.c.l.s4 1966171168
        %v713 = vunpack.c.0.s8 %v712
        %v714 = vlaneseq
        %v715 = vshrl.u32 %v714, 7
        %v716 = vsub.s32 %v713, %v715
        %v717 = vrot.slane %v701, %v716
        %v719 = vunpack.c.l.s4 1966171168
        %v720 = vunpack.c.0.s8 %v719
        %v721 = vlaneseq
        %v722 = vshrl.u32 %v721, 7
        %v723 = vsub.s32 %v720, %v722
        %v724 = vrot.slane %v702, %v723
        %v726 = vunpack.c.l.s4 1966171168
        %v727 = vunpack.c.0.s8 %v726
        %v728 = vlaneseq
        %v729 = vshrl.u32 %v728, 7
        %v730 = vsub.s32 %v727, %v729
        %v731 = vrot.slane %v703, %v730
        %v732 = vcombine.high %v710, %v710
        %v733 = vcombine.high %v717, %v717
        %v734 = vcombine.high %v724, %v724
        %v735 = vcombine.high %v731, %v731
        %v736 = vlaneseq
        %v737 = vshrl.u32 %v736, 7
        %v738 = vsub.s32 0, %v737
        %v739 = vrot.slane %v710, %v738
        %v740 = vlaneseq
        %v741 = vshrl.u32 %v740, 7
        %v742 = vsub.s32 0, %v741
        %v743 = vrot.slane %v724, %v742
        %v744 = vlaneseq
        %v745 = vshrl.u32 %v744, 7
        %v746 = vsub.s32 0, %v745
        %v747 = vrot.slane %v732, %v746
        %v748 = vlaneseq
        %v749 = vshrl.u32 %v748, 7
        %v750 = vsub.s32 0, %v749
        %v751 = vrot.slane %v734, %v750
        %v752 = vlaneseq
        %v753 = vshrl.u32 %v752, 7
        %v754 = vsub.s32 0, %v753
        %v755 = vrot.slane %v717, %v754
        %v756 = vlaneseq
        %v757 = vshrl.u32 %v756, 7
        %v758 = vsub.s32 0, %v757
        %v759 = vrot.slane %v731, %v758
        %v760 = vlaneseq
        %v761 = vshrl.u32 %v760, 7
        %v762 = vsub.s32 0, %v761
        %v763 = vrot.slane %v733, %v762
        %v764 = vlaneseq
        %v765 = vshrl.u32 %v764, 7
        %v766 = vsub.s32 0, %v765
        %v767 = vrot.slane %v735, %v766
        %v776 = vadd.f32 %v739, %v683
        %v777 = vadd.f32 %v743, %v683
        %v778 = vadd.f32 %v747, %v683
        %v779 = vadd.f32 %v751, %v683
        %v780 = vadd.f32 %v755, %v683
        %v781 = vadd.f32 %v759, %v683
        %v782 = vadd.f32 %v763, %v683
        %v783 = vadd.f32 %v767, %v683
        %v784 = vld [vmem:[#allocation9] sm:$0x1]
        %v786 = vlaneseq
        %v787 = vshrl.u32 %v786, 7
        %v788 = vsub.s32 0, %v787
        %v789 = vrot.slane %v784, %v788
        %v791 = vadd.f32 %v776, %v789
        %v792 = vadd.f32 %v777, %v789
        %v793 = vadd.f32 %v778, %v789
        %v794 = vadd.f32 %v779, %v789
        %v795 = vadd.f32 %v780, %v789
        %v796 = vadd.f32 %v781, %v789
        %v797 = vadd.f32 %v782, %v789
        %v798 = vadd.f32 %v783, %v789
        %v799 = vmax.f32 %v791, 0.0
        %v800 = vmax.f32 %v792, 0.0
        %v801 = vmax.f32 %v793, 0.0
        %v802 = vmax.f32 %v794, 0.0
        %v803 = vmax.f32 %v795, 0.0
        %v804 = vmax.f32 %v796, 0.0
        %v805 = vmax.f32 %v797, 0.0
        %v806 = vmax.f32 %v798, 0.0
        %v807 = vld [vmem:[#allocation10] sm:$0xff]
        %v808 = vld [vmem:[#allocation10 + $0x8] sm:$0xff]
        %v809 = vld [vmem:[#allocation12] sm:$0x1]
        %v811 = vlaneseq
        %v812 = vshrl.u32 %v811, 7
        %v813 = vsub.s32 0, %v812
        %v814 = vrot.slane %v809, %v813
        %vm816 = vcmask 130048
        %v818 = vsel %vm816, %v799, 0
        %v821 = vsel %vm816, %v800, 0
        %v824 = vsel %vm816, %v801, 0
        %v827 = vsel %vm816, %v802, 0
        %v830 = vsel %vm816, %v803, 0
        %v833 = vsel %vm816, %v804, 0
        %v836 = vsel %vm816, %v805, 0
        %v839 = vsel %vm816, %v806, 0
        %841 = vmatprep.subr.mxu0 0.0
        %842 = vmatpush1.msra.mxu0 %v807
        %843 = vmatprep.subr.mxu0 0.0
        %844 = vmatpush1.msra.mxu0 %v808
        %845 = vmatprep.subr.mxu0 0.0
        %846 = vmatpush1.msra.mxu0 0.0
        %847 = vmatprep.subr.mxu0 0.0
        %848 = vmatpush1.msra.mxu0 0.0
        %849 = vmatprep.subr.mxu0 0.0
        %850 = vmatpush1.msra.mxu0 0.0
        %851 = vmatprep.subr.mxu0 0.0
        %852 = vmatpush1.msra.mxu0 0.0
        %853 = vmatprep.subr.mxu0 0.0
        %854 = vmatpush1.msra.mxu0 0.0
        %855 = vmatprep.subr.mxu0 0.0
        %856 = vmatpush1.msra.mxu0 0.0
        %857 = vmatprep.subr.mxu0 0.0
        %858 = vmatpush1.msra.mxu0 0.0
        %859 = vmatprep.subr.mxu0 0.0
        %860 = vmatpush1.msra.mxu0 0.0
        %861 = vmatprep.subr.mxu0 0.0
        %862 = vmatpush1.msra.mxu0 0.0
        %863 = vmatprep.subr.mxu0 0.0
        %864 = vmatpush1.msra.mxu0 0.0
        %865 = vmatprep.subr.mxu0 0.0
        %866 = vmatpush1.msra.mxu0 0.0
        %867 = vmatprep.subr.mxu0 0.0
        %868 = vmatpush1.msra.mxu0 0.0
        %869 = vmatprep.subr.mxu0 0.0
        %870 = vmatpush1.msra.mxu0 0.0
        %871 = vmatprep.subr.mxu0 0.0
        %872 = vmatpush1.msra.mxu0 0.0
        %873 = vmatprep.subr.mxu0 0.0
        %874 = vmatpush1.msra.mxu0 0.0
        %875 = vmatprep.subr.mxu0 0.0
        %876 = vmatpush1.msra.mxu0 0.0
        %877 = vmatprep.subr.mxu0 0.0
        %878 = vmatpush1.msra.mxu0 0.0
        %879 = vmatprep.subr.mxu0 0.0
        %880 = vmatpush1.msra.mxu0 0.0
        %881 = vmatprep.subr.mxu0 0.0
        %882 = vmatpush1.msra.mxu0 0.0
        %883 = vmatprep.subr.mxu0 0.0
        %884 = vmatpush1.msra.mxu0 0.0
        %885 = vmatprep.subr.mxu0 0.0
        %886 = vmatpush1.msra.mxu0 0.0
        %887 = vmatprep.subr.mxu0 0.0
        %888 = vmatpush1.msra.mxu0 0.0
        %889 = vmatprep.subr.mxu0 0.0
        %890 = vmatpush1.msra.mxu0 0.0
        %891 = vmatprep.subr.mxu0 0.0
        %892 = vmatpush1.msra.mxu0 0.0
        %893 = vmatprep.subr.mxu0 0.0
        %894 = vmatpush1.msra.mxu0 0.0
        %895 = vmatprep.subr.mxu0 0.0
        %896 = vmatpush1.msra.mxu0 0.0
        %897 = vmatprep.subr.mxu0 0.0
        %898 = vmatpush1.msra.mxu0 0.0
        %899 = vmatprep.subr.mxu0 0.0
        %900 = vmatpush1.msra.mxu0 0.0
        %901 = vmatprep.subr.mxu0 0.0
        %902 = vmatpush1.msra.mxu0 0.0
        %903 = vmatprep.subr.mxu0 0.0
        %904 = vmatpush1.msra.mxu0 0.0
        %905 = vmatprep.mubr.f32.mxu0 0.0
        %906 = vmatmul.mubr.f32.gmra.mrb[0].mxu0 %v818
        %v907 = vpop.f32.mrb[0].mxu0
        %v908 = vadd.f32 %v814, %v907
        %v909 = vpop.f32.mrb[0].mxu0
        %910 = vmatprep.mubr.f32.mxu0 0.0
        %911 = vmatmul.mubr.f32.gmra.mrb[0].mxu0 %v821
        %v912 = vpop.f32.mrb[0].mxu0
        %v913 = vadd.f32 %v814, %v912
        %v914 = vpop.f32.mrb[0].mxu0
        %915 = vmatprep.mubr.f32.mxu0 0.0
        %916 = vmatmul.mubr.f32.gmra.mrb[0].mxu0 %v824
        %v917 = vpop.f32.mrb[0].mxu0
        %v918 = vadd.f32 %v814, %v917
        %v919 = vpop.f32.mrb[0].mxu0
        %920 = vmatprep.mubr.f32.mxu0 0.0
        %921 = vmatmul.mubr.f32.gmra.mrb[0].mxu0 %v827
        %v922 = vpop.f32.mrb[0].mxu0
        %v923 = vadd.f32 %v814, %v922
        %v924 = vpop.f32.mrb[0].mxu0
        %925 = vmatprep.mubr.f32.mxu0 0.0
        %926 = vmatmul.mubr.f32.gmra.mrb[0].mxu0 %v830
        %v927 = vpop.f32.mrb[0].mxu0
        %v928 = vadd.f32 %v814, %v927
        %v929 = vpop.f32.mrb[0].mxu0
        %930 = vmatprep.mubr.f32.mxu0 0.0
        %931 = vmatmul.mubr.f32.gmra.mrb[0].mxu0 %v833
        %v932 = vpop.f32.mrb[0].mxu0
        %v933 = vadd.f32 %v814, %v932
        %v934 = vpop.f32.mrb[0].mxu0
        %935 = vmatprep.mubr.f32.mxu0 0.0
        %936 = vmatmul.mubr.f32.gmra.mrb[0].mxu0 %v836
        %v937 = vpop.f32.mrb[0].mxu0
        %v938 = vadd.f32 %v814, %v937
        %v939 = vpop.f32.mrb[0].mxu0
        %940 = vmatprep.mubr.f32.mxu0 0.0
        %941 = vmatmul.mubr.f32.gmra.mrb[0].mxu0 %v839
        %v942 = vpop.f32.mrb[0].mxu0
        %v943 = vadd.f32 %v814, %v942
        %v944 = vpop.f32.mrb[0].mxu0
        %945 = vdwg.mxu0
        %v946 = vxor.u32 %v908, 2147483648
        %v947 = vxor.u32 %v913, 2147483648
        %v948 = vxor.u32 %v918, 2147483648
        %v949 = vxor.u32 %v923, 2147483648
        %v950 = vxor.u32 %v928, 2147483648
        %v951 = vxor.u32 %v933, 2147483648
        %v952 = vxor.u32 %v938, 2147483648
        %v953 = vxor.u32 %v943, 2147483648
        %v954 = vmul.f32 %v946, 1.442695
        %v955 = vpow.pop %v954
        %v956 = vmul.f32 %v947, 1.442695
        %v957 = vpow.pop %v956
        %v958 = vmul.f32 %v948, 1.442695
        %v959 = vpow.pop %v958
        %v960 = vmul.f32 %v949, 1.442695
        %v961 = vpow.pop %v960
        %v962 = vmul.f32 %v950, 1.442695
        %v963 = vpow.pop %v962
        %v964 = vmul.f32 %v951, 1.442695
        %v965 = vpow.pop %v964
        %v966 = vmul.f32 %v952, 1.442695
        %v967 = vpow.pop %v966
        %v968 = vmul.f32 %v953, 1.442695
        %v969 = vpow.pop %v968
        %v970 = vadd.f32 %v955, 1.0
        %v971 = vadd.f32 %v957, 1.0
        %v972 = vadd.f32 %v959, 1.0
        %v973 = vadd.f32 %v961, 1.0
        %v974 = vadd.f32 %v963, 1.0
        %v975 = vadd.f32 %v965, 1.0
        %v976 = vadd.f32 %v967, 1.0
        %v977 = vadd.f32 %v969, 1.0
        %v978 = vrcp.pop %v970
        %v979 = vmul.f32 1.0, %v978
        %v980 = vrcp.pop %v971
        %v981 = vmul.f32 1.0, %v980
        %v982 = vrcp.pop %v972
        %v983 = vmul.f32 1.0, %v982
        %v984 = vrcp.pop %v973
        %v985 = vmul.f32 1.0, %v984
        %v986 = vrcp.pop %v974
        %v987 = vmul.f32 1.0, %v986
        %v988 = vrcp.pop %v975
        %v989 = vmul.f32 1.0, %v988
        %v990 = vrcp.pop %v976
        %v991 = vmul.f32 1.0, %v990
        %v992 = vrcp.pop %v977
        %v993 = vmul.f32 1.0, %v992
        %v994 = vtanh.pop %v530
        %v995 = vmul.f32 %v979, %v994
        %v996 = vmul.f32 %v981, %v994
        %v997 = vmul.f32 %v983, %v994
        %v998 = vmul.f32 %v985, %v994
        %v999 = vmul.f32 %v987, %v994
        %v1000 = vmul.f32 %v989, %v994
        %v1001 = vmul.f32 %v991, %v994
        %v1002 = vmul.f32 %v993, %v994
        %v1003 = vlaneseq
        %v1004 = vshrl.u32 %v1003, 7
        %v1005 = vlaneseq
        %v1006 = vand.u32 %v1005, 127
        %vm1007 = vcmp.eq.s32.totalorder %v1004, %v1006
        %v1008 = vsel %vm1007, 1, 0
        %v1009 = vcvt.s32.f32 %v1008
        %v1010 = vlaneseq
        %v1011 = vshrl.u32 %v1010, 7
        %v1012 = vsub.s32 0, %v1011
        %v1013 = vrot.slane %v1009, %v1012
        %1015 = vbcast.lane.b32.xlu0 %v1013, 256
        %v1016 = vpop.permute.xlu0 %1015
        %v1017 = vlaneseq
        %v1018 = vshrl.u32 %v1017, 7
        %v1019 = vsub.s32 1, %v1018
        %v1020 = vrot.slane %v1009, %v1019
        %1022 = vbcast.lane.b32.xlu0 %v1020, 256
        %v1023 = vpop.permute.xlu0 %1022
        %v1024 = vlaneseq
        %v1025 = vshrl.u32 %v1024, 7
        %v1026 = vsub.s32 2, %v1025
        %v1027 = vrot.slane %v1009, %v1026
        %1029 = vbcast.lane.b32.xlu0 %v1027, 256
        %v1030 = vpop.permute.xlu0 %1029
        %v1031 = vlaneseq
        %v1032 = vshrl.u32 %v1031, 7
        %v1033 = vsub.s32 3, %v1032
        %v1034 = vrot.slane %v1009, %v1033
        %1036 = vbcast.lane.b32.xlu0 %v1034, 256
        %v1037 = vpop.permute.xlu0 %1036
        %v1038 = vlaneseq
        %v1039 = vshrl.u32 %v1038, 7
        %v1040 = vsub.s32 4, %v1039
        %v1041 = vrot.slane %v1009, %v1040
        %1043 = vbcast.lane.b32.xlu0 %v1041, 256
        %v1044 = vpop.permute.xlu0 %1043
        %v1045 = vlaneseq
        %v1046 = vshrl.u32 %v1045, 7
        %v1047 = vsub.s32 5, %v1046
        %v1048 = vrot.slane %v1009, %v1047
        %1050 = vbcast.lane.b32.xlu0 %v1048, 256
        %v1051 = vpop.permute.xlu0 %1050
        %v1052 = vlaneseq
        %v1053 = vshrl.u32 %v1052, 7
        %v1054 = vsub.s32 6, %v1053
        %v1055 = vrot.slane %v1009, %v1054
        %1057 = vbcast.lane.b32.xlu0 %v1055, 256
        %v1058 = vpop.permute.xlu0 %1057
        %v1059 = vlaneseq
        %v1060 = vshrl.u32 %v1059, 7
        %v1061 = vsub.s32 7, %v1060
        %v1062 = vrot.slane %v1009, %v1061
        %1064 = vbcast.lane.b32.xlu0 %v1062, 256
        %v1065 = vpop.permute.xlu0 %1064
        %v1066 = vmul.f32 %v1016, %v531
        %v1067 = vmul.f32 %v1023, %v531
        %v1068 = vmul.f32 %v1030, %v531
        %v1069 = vmul.f32 %v1037, %v531
        %v1070 = vmul.f32 %v1044, %v531
        %v1071 = vmul.f32 %v1051, %v531
        %v1072 = vmul.f32 %v1058, %v531
        %v1073 = vmul.f32 %v1065, %v531
        %v1074 = vsub.f32 1.0, %v1016
        %v1075 = vsub.f32 1.0, %v1023
        %v1076 = vsub.f32 1.0, %v1030
        %v1077 = vsub.f32 1.0, %v1037
        %v1078 = vsub.f32 1.0, %v1044
        %v1079 = vsub.f32 1.0, %v1051
        %v1080 = vsub.f32 1.0, %v1058
        %v1081 = vsub.f32 1.0, %v1065
        %v1082 = vmul.f32 %v1074, %v995
        %v1083 = vmul.f32 %v1075, %v996
        %v1084 = vmul.f32 %v1076, %v997
        %v1085 = vmul.f32 %v1077, %v998
        %v1086 = vmul.f32 %v1078, %v999
        %v1087 = vmul.f32 %v1079, %v1000
        %v1088 = vmul.f32 %v1080, %v1001
        %v1089 = vmul.f32 %v1081, %v1002
        %v1090 = vadd.f32 %v1066, %v1082
        %v1091 = vadd.f32 %v1067, %v1083
        %v1092 = vadd.f32 %v1068, %v1084
        %v1093 = vadd.f32 %v1069, %v1085
        %v1094 = vadd.f32 %v1070, %v1086
        %v1095 = vadd.f32 %v1071, %v1087
        %v1096 = vadd.f32 %v1072, %v1088
        %v1097 = vadd.f32 %v1073, %v1089
        %v1098 = vld [vmem:[%s9] sm:$0xff]
        %v1099 = vld [vmem:[%s9 + $0x8] sm:$0xff]
        %v1100 = vld [vmem:[%s9 + $0x10] sm:$0xff]
        %v1101 = vld [vmem:[%s9 + $0x18] sm:$0xff]
        %vm1102 = vcmask 261120
        %v1104 = vsel %vm1102, %v530, 0
        %1106 = vmatprep.subr.mxu0 0.0
        %1107 = vmatpush1.msra.mxu0 %v1098
        %1108 = vmatprep.subr.mxu0 0.0
        %1109 = vmatpush1.msra.mxu0 %v1099
        %1110 = vmatprep.subr.mxu0 0.0
        %1111 = vmatpush1.msra.mxu0 %v1100
        %1112 = vmatprep.subr.mxu0 0.0
        %1113 = vmatpush1.msra.mxu0 %v1101
        %1114 = vmatprep.subr.mxu0 0.0
        %1115 = vmatpush1.msra.mxu0 0.0
        %1116 = vmatprep.subr.mxu0 0.0
        %1117 = vmatpush1.msra.mxu0 0.0
        %1118 = vmatprep.subr.mxu0 0.0
        %1119 = vmatpush1.msra.mxu0 0.0
        %1120 = vmatprep.subr.mxu0 0.0
        %1121 = vmatpush1.msra.mxu0 0.0
        %1122 = vmatprep.subr.mxu0 0.0
        %1123 = vmatpush1.msra.mxu0 0.0
        %1124 = vmatprep.subr.mxu0 0.0
        %1125 = vmatpush1.msra.mxu0 0.0
        %1126 = vmatprep.subr.mxu0 0.0
        %1127 = vmatpush1.msra.mxu0 0.0
        %1128 = vmatprep.subr.mxu0 0.0
        %1129 = vmatpush1.msra.mxu0 0.0
        %1130 = vmatprep.subr.mxu0 0.0
        %1131 = vmatpush1.msra.mxu0 0.0
        %1132 = vmatprep.subr.mxu0 0.0
        %1133 = vmatpush1.msra.mxu0 0.0
        %1134 = vmatprep.subr.mxu0 0.0
        %1135 = vmatpush1.msra.mxu0 0.0
        %1136 = vmatprep.subr.mxu0 0.0
        %1137 = vmatpush1.msra.mxu0 0.0
        %1138 = vmatprep.subr.mxu0 0.0
        %1139 = vmatpush1.msra.mxu0 0.0
        %1140 = vmatprep.subr.mxu0 0.0
        %1141 = vmatpush1.msra.mxu0 0.0
        %1142 = vmatprep.subr.mxu0 0.0
        %1143 = vmatpush1.msra.mxu0 0.0
        %1144 = vmatprep.subr.mxu0 0.0
        %1145 = vmatpush1.msra.mxu0 0.0
        %1146 = vmatprep.subr.mxu0 0.0
        %1147 = vmatpush1.msra.mxu0 0.0
        %1148 = vmatprep.subr.mxu0 0.0
        %1149 = vmatpush1.msra.mxu0 0.0
        %1150 = vmatprep.subr.mxu0 0.0
        %1151 = vmatpush1.msra.mxu0 0.0
        %1152 = vmatprep.subr.mxu0 0.0
        %1153 = vmatpush1.msra.mxu0 0.0
        %1154 = vmatprep.subr.mxu0 0.0
        %1155 = vmatpush1.msra.mxu0 0.0
        %1156 = vmatprep.subr.mxu0 0.0
        %1157 = vmatpush1.msra.mxu0 0.0
        %1158 = vmatprep.subr.mxu0 0.0
        %1159 = vmatpush1.msra.mxu0 0.0
        %1160 = vmatprep.subr.mxu0 0.0
        %1161 = vmatpush1.msra.mxu0 0.0
        %1162 = vmatprep.subr.mxu0 0.0
        %1163 = vmatpush1.msra.mxu0 0.0
        %1164 = vmatprep.subr.mxu0 0.0
        %1165 = vmatpush1.msra.mxu0 0.0
        %1166 = vmatprep.subr.mxu0 0.0
        %1167 = vmatpush1.msra.mxu0 0.0
        %1168 = vmatprep.subr.mxu0 0.0
        %1169 = vmatpush1.msra.mxu0 0.0
        %1170 = vmatprep.mubr.f32.mxu0 0.0
        %1171 = vmatmul.mubr.f32.gmra.mrb[0].mxu0 %v1104
        %v1172 = vpop.f32.mrb[0].mxu0
        %v1173 = vadd.f32 0.0, %v1172
        %v1174 = vpop.f32.mrb[0].mxu0
        %1175 = vdwg.mxu0
        %v1176 = vld [vmem:[%s10] sm:$0xff]
        %v1177 = vld [vmem:[%s10 + $0x8] sm:$0xff]
        %v1178 = vld [vmem:[%s10 + $0x10] sm:$0xff]
        %v1179 = vld [vmem:[%s10 + $0x18] sm:$0xff]
        %1180 = vmatprep.subr.mxu0 0.0
        %1181 = vmatpush1.msra.mxu0 %v1176
        %1182 = vmatprep.subr.mxu0 0.0
        %1183 = vmatpush1.msra.mxu0 %v1177
        %1184 = vmatprep.subr.mxu0 0.0
        %1185 = vmatpush1.msra.mxu0 %v1178
        %1186 = vmatprep.subr.mxu0 0.0
        %1187 = vmatpush1.msra.mxu0 %v1179
        %1188 = vmatprep.subr.mxu0 0.0
        %1189 = vmatpush1.msra.mxu0 0.0
        %1190 = vmatprep.subr.mxu0 0.0
        %1191 = vmatpush1.msra.mxu0 0.0
        %1192 = vmatprep.subr.mxu0 0.0
        %1193 = vmatpush1.msra.mxu0 0.0
        %1194 = vmatprep.subr.mxu0 0.0
        %1195 = vmatpush1.msra.mxu0 0.0
        %1196 = vmatprep.subr.mxu0 0.0
        %1197 = vmatpush1.msra.mxu0 0.0
        %1198 = vmatprep.subr.mxu0 0.0
        %1199 = vmatpush1.msra.mxu0 0.0
        %1200 = vmatprep.subr.mxu0 0.0
        %1201 = vmatpush1.msra.mxu0 0.0
        %1202 = vmatprep.subr.mxu0 0.0
        %1203 = vmatpush1.msra.mxu0 0.0
        %1204 = vmatprep.subr.mxu0 0.0
        %1205 = vmatpush1.msra.mxu0 0.0
        %1206 = vmatprep.subr.mxu0 0.0
        %1207 = vmatpush1.msra.mxu0 0.0
        %1208 = vmatprep.subr.mxu0 0.0
        %1209 = vmatpush1.msra.mxu0 0.0
        %1210 = vmatprep.subr.mxu0 0.0
        %1211 = vmatpush1.msra.mxu0 0.0
        %1212 = vmatprep.subr.mxu0 0.0
        %1213 = vmatpush1.msra.mxu0 0.0
        %1214 = vmatprep.subr.mxu0 0.0
        %1215 = vmatpush1.msra.mxu0 0.0
        %1216 = vmatprep.subr.mxu0 0.0
        %1217 = vmatpush1.msra.mxu0 0.0
        %1218 = vmatprep.subr.mxu0 0.0
        %1219 = vmatpush1.msra.mxu0 0.0
        %1220 = vmatprep.subr.mxu0 0.0
        %1221 = vmatpush1.msra.mxu0 0.0
        %1222 = vmatprep.subr.mxu0 0.0
        %1223 = vmatpush1.msra.mxu0 0.0
        %1224 = vmatprep.subr.mxu0 0.0
        %1225 = vmatpush1.msra.mxu0 0.0
        %1226 = vmatprep.subr.mxu0 0.0
        %1227 = vmatpush1.msra.mxu0 0.0
        %1228 = vmatprep.subr.mxu0 0.0
        %1229 = vmatpush1.msra.mxu0 0.0
        %1230 = vmatprep.subr.mxu0 0.0
        %1231 = vmatpush1.msra.mxu0 0.0
        %1232 = vmatprep.subr.mxu0 0.0
        %1233 = vmatpush1.msra.mxu0 0.0
        %1234 = vmatprep.subr.mxu0 0.0
        %1235 = vmatpush1.msra.mxu0 0.0
        %1236 = vmatprep.subr.mxu0 0.0
        %1237 = vmatpush1.msra.mxu0 0.0
        %1238 = vmatprep.subr.mxu0 0.0
        %1239 = vmatpush1.msra.mxu0 0.0
        %1240 = vmatprep.subr.mxu0 0.0
        %1241 = vmatpush1.msra.mxu0 0.0
        %1242 = vmatprep.subr.mxu0 0.0
        %1243 = vmatpush1.msra.mxu0 0.0
        %1244 = vmatprep.mubr.f32.mxu0 0.0
        %1245 = vmatmul.mubr.f32.gmra.mrb[0].mxu0 %v1104
        %v1246 = vpop.f32.mrb[0].mxu0
        %v1247 = vadd.f32 0.0, %v1246
        %v1248 = vpop.f32.mrb[0].mxu0
        %1249 = vdwg.mxu0
        %v1250 = vadd.f32 %v1173, %v1247
        %v1252 = vcombine.high %v1173, %v1173
        %v1254 = vunpack.c.l.s4 1966171168
        %v1255 = vunpack.c.0.s8 %v1254
        %v1256 = vlaneseq
        %v1257 = vshrl.u32 %v1256, 7
        %v1258 = vsub.s32 %v1255, %v1257
        %v1259 = vrot.slane %v1173, %v1258
        %v1261 = vunpack.c.l.s4 1966171168
        %v1262 = vunpack.c.0.s8 %v1261
        %v1263 = vlaneseq
        %v1264 = vshrl.u32 %v1263, 7
        %v1265 = vsub.s32 %v1262, %v1264
        %v1266 = vrot.slane %v1252, %v1265
        %v1267 = vcombine.high %v1259, %v1259
        %v1268 = vcombine.high %v1266, %v1266
        %v1270 = vunpack.c.l.s4 1966171168
        %v1271 = vunpack.c.0.s8 %v1270
        %v1272 = vlaneseq
        %v1273 = vshrl.u32 %v1272, 7
        %v1274 = vsub.s32 %v1271, %v1273
        %v1275 = vrot.slane %v1259, %v1274
        %v1277 = vunpack.c.l.s4 1966171168
        %v1278 = vunpack.c.0.s8 %v1277
        %v1279 = vlaneseq
        %v1280 = vshrl.u32 %v1279, 7
        %v1281 = vsub.s32 %v1278, %v1280
        %v1282 = vrot.slane %v1266, %v1281
        %v1284 = vunpack.c.l.s4 1966171168
        %v1285 = vunpack.c.0.s8 %v1284
        %v1286 = vlaneseq
        %v1287 = vshrl.u32 %v1286, 7
        %v1288 = vsub.s32 %v1285, %v1287
        %v1289 = vrot.slane %v1267, %v1288
        %v1291 = vunpack.c.l.s4 1966171168
        %v1292 = vunpack.c.0.s8 %v1291
        %v1293 = vlaneseq
        %v1294 = vshrl.u32 %v1293, 7
        %v1295 = vsub.s32 %v1292, %v1294
        %v1296 = vrot.slane %v1268, %v1295
        %v1297 = vcombine.high %v1275, %v1275
        %v1298 = vcombine.high %v1282, %v1282
        %v1299 = vcombine.high %v1289, %v1289
        %v1300 = vcombine.high %v1296, %v1296
        %v1302 = vsel %vm1102, %v1090, 0
        %v1305 = vsel %vm1102, %v1091, 0
        %v1308 = vsel %vm1102, %v1092, 0
        %v1311 = vsel %vm1102, %v1093, 0
        %v1314 = vsel %vm1102, %v1094, 0
        %v1317 = vsel %vm1102, %v1095, 0
        %v1320 = vsel %vm1102, %v1096, 0
        %v1323 = vsel %vm1102, %v1097, 0
        %1325 = vmatprep.subr.mxu0 0.0
        %1326 = vmatpush1.msra.mxu0 %v1176
        %1327 = vmatprep.subr.mxu0 0.0
        %1328 = vmatpush1.msra.mxu0 %v1177
        %1329 = vmatprep.subr.mxu0 0.0
        %1330 = vmatpush1.msra.mxu0 %v1178
        %1331 = vmatprep.subr.mxu0 0.0
        %1332 = vmatpush1.msra.mxu0 %v1179
        %1333 = vmatprep.subr.mxu0 0.0
        %1334 = vmatpush1.msra.mxu0 0.0
        %1335 = vmatprep.subr.mxu0 0.0
        %1336 = vmatpush1.msra.mxu0 0.0
        %1337 = vmatprep.subr.mxu0 0.0
        %1338 = vmatpush1.msra.mxu0 0.0
        %1339 = vmatprep.subr.mxu0 0.0
        %1340 = vmatpush1.msra.mxu0 0.0
        %1341 = vmatprep.subr.mxu0 0.0
        %1342 = vmatpush1.msra.mxu0 0.0
        %1343 = vmatprep.subr.mxu0 0.0
        %1344 = vmatpush1.msra.mxu0 0.0
        %1345 = vmatprep.subr.mxu0 0.0
        %1346 = vmatpush1.msra.mxu0 0.0
        %1347 = vmatprep.subr.mxu0 0.0
        %1348 = vmatpush1.msra.mxu0 0.0
        %1349 = vmatprep.subr.mxu0 0.0
        %1350 = vmatpush1.msra.mxu0 0.0
        %1351 = vmatprep.subr.mxu0 0.0
        %1352 = vmatpush1.msra.mxu0 0.0
        %1353 = vmatprep.subr.mxu0 0.0
        %1354 = vmatpush1.msra.mxu0 0.0
        %1355 = vmatprep.subr.mxu0 0.0
        %1356 = vmatpush1.msra.mxu0 0.0
        %1357 = vmatprep.subr.mxu0 0.0
        %1358 = vmatpush1.msra.mxu0 0.0
        %1359 = vmatprep.subr.mxu0 0.0
        %1360 = vmatpush1.msra.mxu0 0.0
        %1361 = vmatprep.subr.mxu0 0.0
        %1362 = vmatpush1.msra.mxu0 0.0
        %1363 = vmatprep.subr.mxu0 0.0
        %1364 = vmatpush1.msra.mxu0 0.0
        %1365 = vmatprep.subr.mxu0 0.0
        %1366 = vmatpush1.msra.mxu0 0.0
        %1367 = vmatprep.subr.mxu0 0.0
        %1368 = vmatpush1.msra.mxu0 0.0
        %1369 = vmatprep.subr.mxu0 0.0
        %1370 = vmatpush1.msra.mxu0 0.0
        %1371 = vmatprep.subr.mxu0 0.0
        %1372 = vmatpush1.msra.mxu0 0.0
        %1373 = vmatprep.subr.mxu0 0.0
        %1374 = vmatpush1.msra.mxu0 0.0
        %1375 = vmatprep.subr.mxu0 0.0
        %1376 = vmatpush1.msra.mxu0 0.0
        %1377 = vmatprep.subr.mxu0 0.0
        %1378 = vmatpush1.msra.mxu0 0.0
        %1379 = vmatprep.subr.mxu0 0.0
        %1380 = vmatpush1.msra.mxu0 0.0
        %1381 = vmatprep.subr.mxu0 0.0
        %1382 = vmatpush1.msra.mxu0 0.0
        %1383 = vmatprep.subr.mxu0 0.0
        %1384 = vmatpush1.msra.mxu0 0.0
        %1385 = vmatprep.subr.mxu0 0.0
        %1386 = vmatpush1.msra.mxu0 0.0
        %1387 = vmatprep.subr.mxu0 0.0
        %1388 = vmatpush1.msra.mxu0 0.0
        %1389 = vmatprep.mubr.f32.mxu0 0.0
        %1390 = vmatmul.mubr.f32.gmra.mrb[0].mxu0 %v1302
        %v1391 = vpop.f32.mrb[0].mxu0
        %v1392 = vadd.f32 0.0, %v1391
        %v1393 = vpop.f32.mrb[0].mxu0
        %1394 = vmatprep.mubr.f32.mxu0 0.0
        %1395 = vmatmul.mubr.f32.gmra.mrb[0].mxu0 %v1305
        %v1396 = vpop.f32.mrb[0].mxu0
        %v1397 = vadd.f32 0.0, %v1396
        %v1398 = vpop.f32.mrb[0].mxu0
        %1399 = vmatprep.mubr.f32.mxu0 0.0
        %1400 = vmatmul.mubr.f32.gmra.mrb[0].mxu0 %v1308
        %v1401 = vpop.f32.mrb[0].mxu0
        %v1402 = vadd.f32 0.0, %v1401
        %v1403 = vpop.f32.mrb[0].mxu0
        %1404 = vmatprep.mubr.f32.mxu0 0.0
        %1405 = vmatmul.mubr.f32.gmra.mrb[0].mxu0 %v1311
        %v1406 = vpop.f32.mrb[0].mxu0
        %v1407 = vadd.f32 0.0, %v1406
        %v1408 = vpop.f32.mrb[0].mxu0
        %1409 = vmatprep.mubr.f32.mxu0 0.0
        %1410 = vmatmul.mubr.f32.gmra.mrb[0].mxu0 %v1314
        %v1411 = vpop.f32.mrb[0].mxu0
        %v1412 = vadd.f32 0.0, %v1411
        %v1413 = vpop.f32.mrb[0].mxu0
        %1414 = vmatprep.mubr.f32.mxu0 0.0
        %1415 = vmatmul.mubr.f32.gmra.mrb[0].mxu0 %v1317
        %v1416 = vpop.f32.mrb[0].mxu0
        %v1417 = vadd.f32 0.0, %v1416
        %v1418 = vpop.f32.mrb[0].mxu0
        %1419 = vmatprep.mubr.f32.mxu0 0.0
        %1420 = vmatmul.mubr.f32.gmra.mrb[0].mxu0 %v1320
        %v1421 = vpop.f32.mrb[0].mxu0
        %v1422 = vadd.f32 0.0, %v1421
        %v1423 = vpop.f32.mrb[0].mxu0
        %1424 = vmatprep.mubr.f32.mxu0 0.0
        %1425 = vmatmul.mubr.f32.gmra.mrb[0].mxu0 %v1323
        %v1426 = vpop.f32.mrb[0].mxu0
        %v1427 = vadd.f32 0.0, %v1426
        %v1428 = vpop.f32.mrb[0].mxu0
        %1429 = vdwg.mxu0
        %v1430 = vlaneseq
        %v1431 = vshrl.u32 %v1430, 7
        %v1432 = vsub.s32 0, %v1431
        %v1433 = vrot.slane %v1275, %v1432
        %v1434 = vlaneseq
        %v1435 = vshrl.u32 %v1434, 7
        %v1436 = vsub.s32 0, %v1435
        %v1437 = vrot.slane %v1289, %v1436
        %v1438 = vlaneseq
        %v1439 = vshrl.u32 %v1438, 7
        %v1440 = vsub.s32 0, %v1439
        %v1441 = vrot.slane %v1297, %v1440
        %v1442 = vlaneseq
        %v1443 = vshrl.u32 %v1442, 7
        %v1444 = vsub.s32 0, %v1443
        %v1445 = vrot.slane %v1299, %v1444
        %v1446 = vlaneseq
        %v1447 = vshrl.u32 %v1446, 7
        %v1448 = vsub.s32 0, %v1447
        %v1449 = vrot.slane %v1282, %v1448
        %v1450 = vlaneseq
        %v1451 = vshrl.u32 %v1450, 7
        %v1452 = vsub.s32 0, %v1451
        %v1453 = vrot.slane %v1296, %v1452
        %v1454 = vlaneseq
        %v1455 = vshrl.u32 %v1454, 7
        %v1456 = vsub.s32 0, %v1455
        %v1457 = vrot.slane %v1298, %v1456
        %v1458 = vlaneseq
        %v1459 = vshrl.u32 %v1458, 7
        %v1460 = vsub.s32 0, %v1459
        %v1461 = vrot.slane %v1300, %v1460
        %v1470 = vadd.f32 %v1433, %v1392
        %v1471 = vadd.f32 %v1437, %v1397
        %v1472 = vadd.f32 %v1441, %v1402
        %v1473 = vadd.f32 %v1445, %v1407
        %v1474 = vadd.f32 %v1449, %v1412
        %v1475 = vadd.f32 %v1453, %v1417
        %v1476 = vadd.f32 %v1457, %v1422
        %v1477 = vadd.f32 %v1461, %v1427
        %vm1478 = vcmp.gt.f32.partialorder %v1250, 0.0
        %v1479 = vmul.f32 %v1250, 0.2
        %v1480 = vsel %vm1478, %v1250, %v1479
        %vm1481 = vcmp.gt.f32.partialorder %v1470, 0.0
        %vm1482 = vcmp.gt.f32.partialorder %v1471, 0.0
        %vm1483 = vcmp.gt.f32.partialorder %v1472, 0.0
        %vm1484 = vcmp.gt.f32.partialorder %v1473, 0.0
        %vm1485 = vcmp.gt.f32.partialorder %v1474, 0.0
        %vm1486 = vcmp.gt.f32.partialorder %v1475, 0.0
        %vm1487 = vcmp.gt.f32.partialorder %v1476, 0.0
        %vm1488 = vcmp.gt.f32.partialorder %v1477, 0.0
        %v1489 = vmul.f32 %v1470, 0.2
        %v1490 = vmul.f32 %v1471, 0.2
        %v1491 = vmul.f32 %v1472, 0.2
        %v1492 = vmul.f32 %v1473, 0.2
        %v1493 = vmul.f32 %v1474, 0.2
        %v1494 = vmul.f32 %v1475, 0.2
        %v1495 = vmul.f32 %v1476, 0.2
        %v1496 = vmul.f32 %v1477, 0.2
        %v1497 = vsel %vm1481, %v1470, %v1489
        %v1498 = vsel %vm1482, %v1471, %v1490
        %v1499 = vsel %vm1483, %v1472, %v1491
        %v1500 = vsel %vm1484, %v1473, %v1492
        %v1501 = vsel %vm1485, %v1474, %v1493
        %v1502 = vsel %vm1486, %v1475, %v1494
        %v1503 = vsel %vm1487, %v1476, %v1495
        %v1504 = vsel %vm1488, %v1477, %v1496
        %1506 = vbcast.lane.b32.xlu0 %v1006, 256
        %v1507 = vpop.permute.xlu0 %1506
        %v1508 = vstv %s529
        %vm1509 = vcmp.lt.s32.totalorder %v1507, %v1508
        %v1510 = vsel %vm1509, 1, 0
        %vm1511 = vcmp.eq.s32.totalorder %v1510, 1
        %v1512 = vsel %vm1511, %v1497, -1e+30
        %v1513 = vsel %vm1511, %v1498, -1e+30
        %v1514 = vsel %vm1511, %v1499, -1e+30
        %v1515 = vsel %vm1511, %v1500, -1e+30
        %v1516 = vsel %vm1511, %v1501, -1e+30
        %v1517 = vsel %vm1511, %v1502, -1e+30
        %v1518 = vsel %vm1511, %v1503, -1e+30
        %v1519 = vsel %vm1511, %v1504, -1e+30
        %v1520 = vsel %vm534, %v1512, -inf
        %v1521 = vrot.slane %v1520, 4
        %v1522 = vmax.f32 %v1520, %v1521
        %v1523 = vrot.slane %v1522, 2
        %v1524 = vmax.f32 %v1522, %v1523
        %v1525 = vrot.slane %v1524, 1
        %v1526 = vmax.f32 %v1524, %v1525
        %v1527 = vsel %vm534, %v1513, -inf
        %v1528 = vrot.slane %v1527, 4
        %v1529 = vmax.f32 %v1527, %v1528
        %v1530 = vrot.slane %v1529, 2
        %v1531 = vmax.f32 %v1529, %v1530
        %v1532 = vrot.slane %v1531, 1
        %v1533 = vmax.f32 %v1531, %v1532
        %v1534 = vsel %vm534, %v1514, -inf
        %v1535 = vrot.slane %v1534, 4
        %v1536 = vmax.f32 %v1534, %v1535
        %v1537 = vrot.slane %v1536, 2
        %v1538 = vmax.f32 %v1536, %v1537
        %v1539 = vrot.slane %v1538, 1
        %v1540 = vmax.f32 %v1538, %v1539
        %v1541 = vsel %vm534, %v1515, -inf
        %v1542 = vrot.slane %v1541, 4
        %v1543 = vmax.f32 %v1541, %v1542
        %v1544 = vrot.slane %v1543, 2
        %v1545 = vmax.f32 %v1543, %v1544
        %v1546 = vrot.slane %v1545, 1
        %v1547 = vmax.f32 %v1545, %v1546
        %v1548 = vsel %vm534, %v1516, -inf
        %v1549 = vrot.slane %v1548, 4
        %v1550 = vmax.f32 %v1548, %v1549
        %v1551 = vrot.slane %v1550, 2
        %v1552 = vmax.f32 %v1550, %v1551
        %v1553 = vrot.slane %v1552, 1
        %v1554 = vmax.f32 %v1552, %v1553
        %v1555 = vsel %vm534, %v1517, -inf
        %v1556 = vrot.slane %v1555, 4
        %v1557 = vmax.f32 %v1555, %v1556
        %v1558 = vrot.slane %v1557, 2
        %v1559 = vmax.f32 %v1557, %v1558
        %v1560 = vrot.slane %v1559, 1
        %v1561 = vmax.f32 %v1559, %v1560
        %v1562 = vsel %vm534, %v1518, -inf
        %v1563 = vrot.slane %v1562, 4
        %v1564 = vmax.f32 %v1562, %v1563
        %v1565 = vrot.slane %v1564, 2
        %v1566 = vmax.f32 %v1564, %v1565
        %v1567 = vrot.slane %v1566, 1
        %v1568 = vmax.f32 %v1566, %v1567
        %v1569 = vsel %vm534, %v1519, -inf
        %v1570 = vrot.slane %v1569, 4
        %v1571 = vmax.f32 %v1569, %v1570
        %v1572 = vrot.slane %v1571, 2
        %v1573 = vmax.f32 %v1571, %v1572
        %v1574 = vrot.slane %v1573, 1
        %v1575 = vmax.f32 %v1573, %v1574
        %vm1584 = vcmask 1041409
        %v1585 = vsel %vm1584, %v1533, %v1526
        %vm1586 = vcmask 1042434
        %v1587 = vsel %vm1586, %v1540, %v1585
        %vm1588 = vcmask 1043459
        %v1589 = vsel %vm1588, %v1547, %v1587
        %vm1590 = vcmask 1044484
        %v1591 = vsel %vm1590, %v1554, %v1589
        %vm1592 = vcmask 1045509
        %v1593 = vsel %vm1592, %v1561, %v1591
        %vm1594 = vcmask 1046534
        %v1595 = vsel %vm1594, %v1568, %v1593
        %vm1596 = vcmask 1047559
        %v1597 = vsel %vm1596, %v1575, %v1595
        %v1599 = vmax.f32 %v1480, %v1597
        %v1600 = vsub.f32 %v1480, %v1599
        %v1601 = vmul.f32 %v1600, 1.442695
        %v1602 = vpow.pop %v1601
        %v1604 = vcombine.high %v1599, %v1599
        %v1606 = vunpack.c.l.s4 1966171168
        %v1607 = vunpack.c.0.s8 %v1606
        %v1608 = vlaneseq
        %v1609 = vshrl.u32 %v1608, 7
        %v1610 = vsub.s32 %v1607, %v1609
        %v1611 = vrot.slane %v1599, %v1610
        %v1613 = vunpack.c.l.s4 1966171168
        %v1614 = vunpack.c.0.s8 %v1613
        %v1615 = vlaneseq
        %v1616 = vshrl.u32 %v1615, 7
        %v1617 = vsub.s32 %v1614, %v1616
        %v1618 = vrot.slane %v1604, %v1617
        %v1619 = vcombine.high %v1611, %v1611
        %v1620 = vcombine.high %v1618, %v1618
        %v1622 = vunpack.c.l.s4 1966171168
        %v1623 = vunpack.c.0.s8 %v1622
        %v1624 = vlaneseq
        %v1625 = vshrl.u32 %v1624, 7
        %v1626 = vsub.s32 %v1623, %v1625
        %v1627 = vrot.slane %v1611, %v1626
        %v1629 = vunpack.c.l.s4 1966171168
        %v1630 = vunpack.c.0.s8 %v1629
        %v1631 = vlaneseq
        %v1632 = vshrl.u32 %v1631, 7
        %v1633 = vsub.s32 %v1630, %v1632
        %v1634 = vrot.slane %v1618, %v1633
        %v1636 = vunpack.c.l.s4 1966171168
        %v1637 = vunpack.c.0.s8 %v1636
        %v1638 = vlaneseq
        %v1639 = vshrl.u32 %v1638, 7
        %v1640 = vsub.s32 %v1637, %v1639
        %v1641 = vrot.slane %v1619, %v1640
        %v1643 = vunpack.c.l.s4 1966171168
        %v1644 = vunpack.c.0.s8 %v1643
        %v1645 = vlaneseq
        %v1646 = vshrl.u32 %v1645, 7
        %v1647 = vsub.s32 %v1644, %v1646
        %v1648 = vrot.slane %v1620, %v1647
        %v1649 = vcombine.high %v1627, %v1627
        %v1650 = vcombine.high %v1634, %v1634
        %v1651 = vcombine.high %v1641, %v1641
        %v1652 = vcombine.high %v1648, %v1648
        %v1653 = vlaneseq
        %v1654 = vshrl.u32 %v1653, 7
        %v1655 = vsub.s32 0, %v1654
        %v1656 = vrot.slane %v1627, %v1655
        %v1657 = vlaneseq
        %v1658 = vshrl.u32 %v1657, 7
        %v1659 = vsub.s32 0, %v1658
        %v1660 = vrot.slane %v1641, %v1659
        %v1661 = vlaneseq
        %v1662 = vshrl.u32 %v1661, 7
        %v1663 = vsub.s32 0, %v1662
        %v1664 = vrot.slane %v1649, %v1663
        %v1665 = vlaneseq
        %v1666 = vshrl.u32 %v1665, 7
        %v1667 = vsub.s32 0, %v1666
        %v1668 = vrot.slane %v1651, %v1667
        %v1669 = vlaneseq
        %v1670 = vshrl.u32 %v1669, 7
        %v1671 = vsub.s32 0, %v1670
        %v1672 = vrot.slane %v1634, %v1671
        %v1673 = vlaneseq
        %v1674 = vshrl.u32 %v1673, 7
        %v1675 = vsub.s32 0, %v1674
        %v1676 = vrot.slane %v1648, %v1675
        %v1677 = vlaneseq
        %v1678 = vshrl.u32 %v1677, 7
        %v1679 = vsub.s32 0, %v1678
        %v1680 = vrot.slane %v1650, %v1679
        %v1681 = vlaneseq
        %v1682 = vshrl.u32 %v1681, 7
        %v1683 = vsub.s32 0, %v1682
        %v1684 = vrot.slane %v1652, %v1683
        %v1693 = vsub.f32 %v1512, %v1656
        %v1694 = vsub.f32 %v1513, %v1660
        %v1695 = vsub.f32 %v1514, %v1664
        %v1696 = vsub.f32 %v1515, %v1668
        %v1697 = vsub.f32 %v1516, %v1672
        %v1698 = vsub.f32 %v1517, %v1676
        %v1699 = vsub.f32 %v1518, %v1680
        %v1700 = vsub.f32 %v1519, %v1684
        %v1701 = vmul.f32 %v1693, 1.442695
        %v1702 = vpow.pop %v1701
        %v1703 = vmul.f32 %v1694, 1.442695
        %v1704 = vpow.pop %v1703
        %v1705 = vmul.f32 %v1695, 1.442695
        %v1706 = vpow.pop %v1705
        %v1707 = vmul.f32 %v1696, 1.442695
        %v1708 = vpow.pop %v1707
        %v1709 = vmul.f32 %v1697, 1.442695
        %v1710 = vpow.pop %v1709
        %v1711 = vmul.f32 %v1698, 1.442695
        %v1712 = vpow.pop %v1711
        %v1713 = vmul.f32 %v1699, 1.442695
        %v1714 = vpow.pop %v1713
        %v1715 = vmul.f32 %v1700, 1.442695
        %v1716 = vpow.pop %v1715
        %v1717 = vsel %vm534, %v1702, 0.0
        %v1718 = vrot.slane %v1717, 4
        %v1719 = vadd.f32 %v1717, %v1718
        %v1720 = vrot.slane %v1719, 2
        %v1721 = vadd.f32 %v1719, %v1720
        %v1722 = vrot.slane %v1721, 1
        %v1723 = vadd.f32 %v1721, %v1722
        %v1724 = vsel %vm534, %v1704, 0.0
        %v1725 = vrot.slane %v1724, 4
        %v1726 = vadd.f32 %v1724, %v1725
        %v1727 = vrot.slane %v1726, 2
        %v1728 = vadd.f32 %v1726, %v1727
        %v1729 = vrot.slane %v1728, 1
        %v1730 = vadd.f32 %v1728, %v1729
        %v1731 = vsel %vm534, %v1706, 0.0
        %v1732 = vrot.slane %v1731, 4
        %v1733 = vadd.f32 %v1731, %v1732
        %v1734 = vrot.slane %v1733, 2
        %v1735 = vadd.f32 %v1733, %v1734
        %v1736 = vrot.slane %v1735, 1
        %v1737 = vadd.f32 %v1735, %v1736
        %v1738 = vsel %vm534, %v1708, 0.0
        %v1739 = vrot.slane %v1738, 4
        %v1740 = vadd.f32 %v1738, %v1739
        %v1741 = vrot.slane %v1740, 2
        %v1742 = vadd.f32 %v1740, %v1741
        %v1743 = vrot.slane %v1742, 1
        %v1744 = vadd.f32 %v1742, %v1743
        %v1745 = vsel %vm534, %v1710, 0.0
        %v1746 = vrot.slane %v1745, 4
        %v1747 = vadd.f32 %v1745, %v1746
        %v1748 = vrot.slane %v1747, 2
        %v1749 = vadd.f32 %v1747, %v1748
        %v1750 = vrot.slane %v1749, 1
        %v1751 = vadd.f32 %v1749, %v1750
        %v1752 = vsel %vm534, %v1712, 0.0
        %v1753 = vrot.slane %v1752, 4
        %v1754 = vadd.f32 %v1752, %v1753
        %v1755 = vrot.slane %v1754, 2
        %v1756 = vadd.f32 %v1754, %v1755
        %v1757 = vrot.slane %v1756, 1
        %v1758 = vadd.f32 %v1756, %v1757
        %v1759 = vsel %vm534, %v1714, 0.0
        %v1760 = vrot.slane %v1759, 4
        %v1761 = vadd.f32 %v1759, %v1760
        %v1762 = vrot.slane %v1761, 2
        %v1763 = vadd.f32 %v1761, %v1762
        %v1764 = vrot.slane %v1763, 1
        %v1765 = vadd.f32 %v1763, %v1764
        %v1766 = vsel %vm534, %v1716, 0.0
        %v1767 = vrot.slane %v1766, 4
        %v1768 = vadd.f32 %v1766, %v1767
        %v1769 = vrot.slane %v1768, 2
        %v1770 = vadd.f32 %v1768, %v1769
        %v1771 = vrot.slane %v1770, 1
        %v1772 = vadd.f32 %v1770, %v1771
        %v1781 = vsel %vm1584, %v1730, %v1723
        %v1782 = vsel %vm1586, %v1737, %v1781
        %v1783 = vsel %vm1588, %v1744, %v1782
        %v1784 = vsel %vm1590, %v1751, %v1783
        %v1785 = vsel %vm1592, %v1758, %v1784
        %v1786 = vsel %vm1594, %v1765, %v1785
        %v1787 = vsel %vm1596, %v1772, %v1786
        %v1789 = vadd.f32 %v1602, %v1787
        %v1790 = vrcp.pop %v1789
        %v1791 = vmul.f32 %v1602, %v1790
        %v1793 = vcombine.high %v1790, %v1790
        %v1795 = vunpack.c.l.s4 1966171168
        %v1796 = vunpack.c.0.s8 %v1795
        %v1797 = vlaneseq
        %v1798 = vshrl.u32 %v1797, 7
        %v1799 = vsub.s32 %v1796, %v1798
        %v1800 = vrot.slane %v1790, %v1799
        %v1802 = vunpack.c.l.s4 1966171168
        %v1803 = vunpack.c.0.s8 %v1802
        %v1804 = vlaneseq
        %v1805 = vshrl.u32 %v1804, 7
        %v1806 = vsub.s32 %v1803, %v1805
        %v1807 = vrot.slane %v1793, %v1806
        %v1808 = vcombine.high %v1800, %v1800
        %v1809 = vcombine.high %v1807, %v1807
        %v1811 = vunpack.c.l.s4 1966171168
        %v1812 = vunpack.c.0.s8 %v1811
        %v1813 = vlaneseq
        %v1814 = vshrl.u32 %v1813, 7
        %v1815 = vsub.s32 %v1812, %v1814
        %v1816 = vrot.slane %v1800, %v1815
        %v1818 = vunpack.c.l.s4 1966171168
        %v1819 = vunpack.c.0.s8 %v1818
        %v1820 = vlaneseq
        %v1821 = vshrl.u32 %v1820, 7
        %v1822 = vsub.s32 %v1819, %v1821
        %v1823 = vrot.slane %v1807, %v1822
        %v1825 = vunpack.c.l.s4 1966171168
        %v1826 = vunpack.c.0.s8 %v1825
        %v1827 = vlaneseq
        %v1828 = vshrl.u32 %v1827, 7
        %v1829 = vsub.s32 %v1826, %v1828
        %v1830 = vrot.slane %v1808, %v1829
        %v1832 = vunpack.c.l.s4 1966171168
        %v1833 = vunpack.c.0.s8 %v1832
        %v1834 = vlaneseq
        %v1835 = vshrl.u32 %v1834, 7
        %v1836 = vsub.s32 %v1833, %v1835
        %v1837 = vrot.slane %v1809, %v1836
        %v1838 = vcombine.high %v1816, %v1816
        %v1839 = vcombine.high %v1823, %v1823
        %v1840 = vcombine.high %v1830, %v1830
        %v1841 = vcombine.high %v1837, %v1837
        %v1842 = vlaneseq
        %v1843 = vshrl.u32 %v1842, 7
        %v1844 = vsub.s32 0, %v1843
        %v1845 = vrot.slane %v1816, %v1844
        %v1846 = vlaneseq
        %v1847 = vshrl.u32 %v1846, 7
        %v1848 = vsub.s32 0, %v1847
        %v1849 = vrot.slane %v1830, %v1848
        %v1850 = vlaneseq
        %v1851 = vshrl.u32 %v1850, 7
        %v1852 = vsub.s32 0, %v1851
        %v1853 = vrot.slane %v1838, %v1852
        %v1854 = vlaneseq
        %v1855 = vshrl.u32 %v1854, 7
        %v1856 = vsub.s32 0, %v1855
        %v1857 = vrot.slane %v1840, %v1856
        %v1858 = vlaneseq
        %v1859 = vshrl.u32 %v1858, 7
        %v1860 = vsub.s32 0, %v1859
        %v1861 = vrot.slane %v1823, %v1860
        %v1862 = vlaneseq
        %v1863 = vshrl.u32 %v1862, 7
        %v1864 = vsub.s32 0, %v1863
        %v1865 = vrot.slane %v1837, %v1864
        %v1866 = vlaneseq
        %v1867 = vshrl.u32 %v1866, 7
        %v1868 = vsub.s32 0, %v1867
        %v1869 = vrot.slane %v1839, %v1868
        %v1870 = vlaneseq
        %v1871 = vshrl.u32 %v1870, 7
        %v1872 = vsub.s32 0, %v1871
        %v1873 = vrot.slane %v1841, %v1872
        %v1882 = vmul.f32 %v1702, %v1845
        %v1883 = vmul.f32 %v1704, %v1849
        %v1884 = vmul.f32 %v1706, %v1853
        %v1885 = vmul.f32 %v1708, %v1857
        %v1886 = vmul.f32 %v1710, %v1861
        %v1887 = vmul.f32 %v1712, %v1865
        %v1888 = vmul.f32 %v1714, %v1869
        %v1889 = vmul.f32 %v1716, %v1873
        %1891 = vset.pattern.permute.xlu0 0
        %1892 = vperm.xlu0 %1891, %v1791
        %v1893 = vpop.permute.xlu0 %1892
        %v1895 = vmul.f32 %v1893, %v530
        %1897 = vset.pattern.permute.xlu0 0
        %1898 = vperm.xlu0 %1897, %v1882
        %v1899 = vpop.permute.xlu0 %1898
        %1902 = vset.pattern.permute.xlu0 0
        %1903 = vperm.xlu0 %1902, %v1883
        %v1904 = vpop.permute.xlu0 %1903
        %1907 = vset.pattern.permute.xlu0 0
        %1908 = vperm.xlu0 %1907, %v1884
        %v1909 = vpop.permute.xlu0 %1908
        %1912 = vset.pattern.permute.xlu0 0
        %1913 = vperm.xlu0 %1912, %v1885
        %v1914 = vpop.permute.xlu0 %1913
        %1917 = vset.pattern.permute.xlu0 0
        %1918 = vperm.xlu0 %1917, %v1886
        %v1919 = vpop.permute.xlu0 %1918
        %1922 = vset.pattern.permute.xlu0 0
        %1923 = vperm.xlu0 %1922, %v1887
        %v1924 = vpop.permute.xlu0 %1923
        %1927 = vset.pattern.permute.xlu0 0
        %1928 = vperm.xlu0 %1927, %v1888
        %v1929 = vpop.permute.xlu0 %1928
        %1932 = vset.pattern.permute.xlu0 0
        %1933 = vperm.xlu0 %1932, %v1889
        %v1934 = vpop.permute.xlu0 %1933
        %v1936 = vmul.f32 %v1899, %v1090
        %v1937 = vmul.f32 %v1904, %v1091
        %v1938 = vmul.f32 %v1909, %v1092
        %v1939 = vmul.f32 %v1914, %v1093
        %v1940 = vmul.f32 %v1919, %v1094
        %v1941 = vmul.f32 %v1924, %v1095
        %v1942 = vmul.f32 %v1929, %v1096
        %v1943 = vmul.f32 %v1934, %v1097
        %v1944 = vsel %vm1102, %v1936, 0.0
        %v1945 = vrot.slane %v1944, 4
        %v1946 = vadd.f32 %v1944, %v1945
        %v1947 = vrot.slane %v1946, 2
        %v1948 = vadd.f32 %v1946, %v1947
        %v1949 = vrot.slane %v1948, 1
        %v1950 = vadd.f32 %v1948, %v1949
        %v1951 = vsel %vm1102, %v1937, 0.0
        %v1952 = vrot.slane %v1951, 4
        %v1953 = vadd.f32 %v1951, %v1952
        %v1954 = vrot.slane %v1953, 2
        %v1955 = vadd.f32 %v1953, %v1954
        %v1956 = vrot.slane %v1955, 1
        %v1957 = vadd.f32 %v1955, %v1956
        %v1958 = vsel %vm1102, %v1938, 0.0
        %v1959 = vrot.slane %v1958, 4
        %v1960 = vadd.f32 %v1958, %v1959
        %v1961 = vrot.slane %v1960, 2
        %v1962 = vadd.f32 %v1960, %v1961
        %v1963 = vrot.slane %v1962, 1
        %v1964 = vadd.f32 %v1962, %v1963
        %v1965 = vsel %vm1102, %v1939, 0.0
        %v1966 = vrot.slane %v1965, 4
        %v1967 = vadd.f32 %v1965, %v1966
        %v1968 = vrot.slane %v1967, 2
        %v1969 = vadd.f32 %v1967, %v1968
        %v1970 = vrot.slane %v1969, 1
        %v1971 = vadd.f32 %v1969, %v1970
        %v1972 = vsel %vm1102, %v1940, 0.0
        %v1973 = vrot.slane %v1972, 4
        %v1974 = vadd.f32 %v1972, %v1973
        %v1975 = vrot.slane %v1974, 2
        %v1976 = vadd.f32 %v1974, %v1975
        %v1977 = vrot.slane %v1976, 1
        %v1978 = vadd.f32 %v1976, %v1977
        %v1979 = vsel %vm1102, %v1941, 0.0
        %v1980 = vrot.slane %v1979, 4
        %v1981 = vadd.f32 %v1979, %v1980
        %v1982 = vrot.slane %v1981, 2
        %v1983 = vadd.f32 %v1981, %v1982
        %v1984 = vrot.slane %v1983, 1
        %v1985 = vadd.f32 %v1983, %v1984
        %v1986 = vsel %vm1102, %v1942, 0.0
        %v1987 = vrot.slane %v1986, 4
        %v1988 = vadd.f32 %v1986, %v1987
        %v1989 = vrot.slane %v1988, 2
        %v1990 = vadd.f32 %v1988, %v1989
        %v1991 = vrot.slane %v1990, 1
        %v1992 = vadd.f32 %v1990, %v1991
        %v1993 = vsel %vm1102, %v1943, 0.0
        %v1994 = vrot.slane %v1993, 4
        %v1995 = vadd.f32 %v1993, %v1994
        %v1996 = vrot.slane %v1995, 2
        %v1997 = vadd.f32 %v1995, %v1996
        %v1998 = vrot.slane %v1997, 1
        %v1999 = vadd.f32 %v1997, %v1998
        %v2008 = vsel %vm1584, %v1957, %v1950
        %v2009 = vsel %vm1586, %v1964, %v2008
        %v2010 = vsel %vm1588, %v1971, %v2009
        %v2011 = vsel %vm1590, %v1978, %v2010
        %v2012 = vsel %vm1592, %v1985, %v2011
        %v2013 = vsel %vm1594, %v1992, %v2012
        %v2014 = vsel %vm1596, %v1999, %v2013
        %v2016 = vadd.f32 %v1895, %v2014
        %2017 = vset.pattern.permute.xlu0 1
        %2018 = vperm.xlu0 %2017, %v1791
        %v2019 = vpop.permute.xlu0 %2018
        %v2021 = vmul.f32 %v2019, %v530
        %2022 = vset.pattern.permute.xlu0 1
        %2023 = vperm.xlu0 %2022, %v1882
        %v2024 = vpop.permute.xlu0 %2023
        %2026 = vset.pattern.permute.xlu0 1
        %2027 = vperm.xlu0 %2026, %v1883
        %v2028 = vpop.permute.xlu0 %2027
        %2030 = vset.pattern.permute.xlu0 1
        %2031 = vperm.xlu0 %2030, %v1884
        %v2032 = vpop.permute.xlu0 %2031
        %2034 = vset.pattern.permute.xlu0 1
        %2035 = vperm.xlu0 %2034, %v1885
        %v2036 = vpop.permute.xlu0 %2035
        %2038 = vset.pattern.permute.xlu0 1
        %2039 = vperm.xlu0 %2038, %v1886
        %v2040 = vpop.permute.xlu0 %2039
        %2042 = vset.pattern.permute.xlu0 1
        %2043 = vperm.xlu0 %2042, %v1887
        %v2044 = vpop.permute.xlu0 %2043
        %2046 = vset.pattern.permute.xlu0 1
        %2047 = vperm.xlu0 %2046, %v1888
        %v2048 = vpop.permute.xlu0 %2047
        %2050 = vset.pattern.permute.xlu0 1
        %2051 = vperm.xlu0 %2050, %v1889
        %v2052 = vpop.permute.xlu0 %2051
        %v2054 = vmul.f32 %v2024, %v1090
        %v2055 = vmul.f32 %v2028, %v1091
        %v2056 = vmul.f32 %v2032, %v1092
        %v2057 = vmul.f32 %v2036, %v1093
        %v2058 = vmul.f32 %v2040, %v1094
        %v2059 = vmul.f32 %v2044, %v1095
        %v2060 = vmul.f32 %v2048, %v1096
        %v2061 = vmul.f32 %v2052, %v1097
        %v2062 = vsel %vm1102, %v2054, 0.0
        %v2063 = vrot.slane %v2062, 4
        %v2064 = vadd.f32 %v2062, %v2063
        %v2065 = vrot.slane %v2064, 2
        %v2066 = vadd.f32 %v2064, %v2065
        %v2067 = vrot.slane %v2066, 1
        %v2068 = vadd.f32 %v2066, %v2067
        %v2069 = vsel %vm1102, %v2055, 0.0
        %v2070 = vrot.slane %v2069, 4
        %v2071 = vadd.f32 %v2069, %v2070
        %v2072 = vrot.slane %v2071, 2
        %v2073 = vadd.f32 %v2071, %v2072
        %v2074 = vrot.slane %v2073, 1
        %v2075 = vadd.f32 %v2073, %v2074
        %v2076 = vsel %vm1102, %v2056, 0.0
        %v2077 = vrot.slane %v2076, 4
        %v2078 = vadd.f32 %v2076, %v2077
        %v2079 = vrot.slane %v2078, 2
        %v2080 = vadd.f32 %v2078, %v2079
        %v2081 = vrot.slane %v2080, 1
        %v2082 = vadd.f32 %v2080, %v2081
        %v2083 = vsel %vm1102, %v2057, 0.0
        %v2084 = vrot.slane %v2083, 4
        %v2085 = vadd.f32 %v2083, %v2084
        %v2086 = vrot.slane %v2085, 2
        %v2087 = vadd.f32 %v2085, %v2086
        %v2088 = vrot.slane %v2087, 1
        %v2089 = vadd.f32 %v2087, %v2088
        %v2090 = vsel %vm1102, %v2058, 0.0
        %v2091 = vrot.slane %v2090, 4
        %v2092 = vadd.f32 %v2090, %v2091
        %v2093 = vrot.slane %v2092, 2
        %v2094 = vadd.f32 %v2092, %v2093
        %v2095 = vrot.slane %v2094, 1
        %v2096 = vadd.f32 %v2094, %v2095
        %v2097 = vsel %vm1102, %v2059, 0.0
        %v2098 = vrot.slane %v2097, 4
        %v2099 = vadd.f32 %v2097, %v2098
        %v2100 = vrot.slane %v2099, 2
        %v2101 = vadd.f32 %v2099, %v2100
        %v2102 = vrot.slane %v2101, 1
        %v2103 = vadd.f32 %v2101, %v2102
        %v2104 = vsel %vm1102, %v2060, 0.0
        %v2105 = vrot.slane %v2104, 4
        %v2106 = vadd.f32 %v2104, %v2105
        %v2107 = vrot.slane %v2106, 2
        %v2108 = vadd.f32 %v2106, %v2107
        %v2109 = vrot.slane %v2108, 1
        %v2110 = vadd.f32 %v2108, %v2109
        %v2111 = vsel %vm1102, %v2061, 0.0
        %v2112 = vrot.slane %v2111, 4
        %v2113 = vadd.f32 %v2111, %v2112
        %v2114 = vrot.slane %v2113, 2
        %v2115 = vadd.f32 %v2113, %v2114
        %v2116 = vrot.slane %v2115, 1
        %v2117 = vadd.f32 %v2115, %v2116
        %v2126 = vsel %vm1584, %v2075, %v2068
        %v2127 = vsel %vm1586, %v2082, %v2126
        %v2128 = vsel %vm1588, %v2089, %v2127
        %v2129 = vsel %vm1590, %v2096, %v2128
        %v2130 = vsel %vm1592, %v2103, %v2129
        %v2131 = vsel %vm1594, %v2110, %v2130
        %v2132 = vsel %vm1596, %v2117, %v2131
        %v2134 = vadd.f32 %v2021, %v2132
        %2135 = vset.pattern.permute.xlu0 2
        %2136 = vperm.xlu0 %2135, %v1791
        %v2137 = vpop.permute.xlu0 %2136
        %v2139 = vmul.f32 %v2137, %v530
        %2140 = vset.pattern.permute.xlu0 2
        %2141 = vperm.xlu0 %2140, %v1882
        %v2142 = vpop.permute.xlu0 %2141
        %2144 = vset.pattern.permute.xlu0 2
        %2145 = vperm.xlu0 %2144, %v1883
        %v2146 = vpop.permute.xlu0 %2145
        %2148 = vset.pattern.permute.xlu0 2
        %2149 = vperm.xlu0 %2148, %v1884
        %v2150 = vpop.permute.xlu0 %2149
        %2152 = vset.pattern.permute.xlu0 2
        %2153 = vperm.xlu0 %2152, %v1885
        %v2154 = vpop.permute.xlu0 %2153
        %2156 = vset.pattern.permute.xlu0 2
        %2157 = vperm.xlu0 %2156, %v1886
        %v2158 = vpop.permute.xlu0 %2157
        %2160 = vset.pattern.permute.xlu0 2
        %2161 = vperm.xlu0 %2160, %v1887
        %v2162 = vpop.permute.xlu0 %2161
        %2164 = vset.pattern.permute.xlu0 2
        %2165 = vperm.xlu0 %2164, %v1888
        %v2166 = vpop.permute.xlu0 %2165
        %2168 = vset.pattern.permute.xlu0 2
        %2169 = vperm.xlu0 %2168, %v1889
        %v2170 = vpop.permute.xlu0 %2169
        %v2172 = vmul.f32 %v2142, %v1090
        %v2173 = vmul.f32 %v2146, %v1091
        %v2174 = vmul.f32 %v2150, %v1092
        %v2175 = vmul.f32 %v2154, %v1093
        %v2176 = vmul.f32 %v2158, %v1094
        %v2177 = vmul.f32 %v2162, %v1095
        %v2178 = vmul.f32 %v2166, %v1096
        %v2179 = vmul.f32 %v2170, %v1097
        %v2180 = vsel %vm1102, %v2172, 0.0
        %v2181 = vrot.slane %v2180, 4
        %v2182 = vadd.f32 %v2180, %v2181
        %v2183 = vrot.slane %v2182, 2
        %v2184 = vadd.f32 %v2182, %v2183
        %v2185 = vrot.slane %v2184, 1
        %v2186 = vadd.f32 %v2184, %v2185
        %v2187 = vsel %vm1102, %v2173, 0.0
        %v2188 = vrot.slane %v2187, 4
        %v2189 = vadd.f32 %v2187, %v2188
        %v2190 = vrot.slane %v2189, 2
        %v2191 = vadd.f32 %v2189, %v2190
        %v2192 = vrot.slane %v2191, 1
        %v2193 = vadd.f32 %v2191, %v2192
        %v2194 = vsel %vm1102, %v2174, 0.0
        %v2195 = vrot.slane %v2194, 4
        %v2196 = vadd.f32 %v2194, %v2195
        %v2197 = vrot.slane %v2196, 2
        %v2198 = vadd.f32 %v2196, %v2197
        %v2199 = vrot.slane %v2198, 1
        %v2200 = vadd.f32 %v2198, %v2199
        %v2201 = vsel %vm1102, %v2175, 0.0
        %v2202 = vrot.slane %v2201, 4
        %v2203 = vadd.f32 %v2201, %v2202
        %v2204 = vrot.slane %v2203, 2
        %v2205 = vadd.f32 %v2203, %v2204
        %v2206 = vrot.slane %v2205, 1
        %v2207 = vadd.f32 %v2205, %v2206
        %v2208 = vsel %vm1102, %v2176, 0.0
        %v2209 = vrot.slane %v2208, 4
        %v2210 = vadd.f32 %v2208, %v2209
        %v2211 = vrot.slane %v2210, 2
        %v2212 = vadd.f32 %v2210, %v2211
        %v2213 = vrot.slane %v2212, 1
        %v2214 = vadd.f32 %v2212, %v2213
        %v2215 = vsel %vm1102, %v2177, 0.0
        %v2216 = vrot.slane %v2215, 4
        %v2217 = vadd.f32 %v2215, %v2216
        %v2218 = vrot.slane %v2217, 2
        %v2219 = vadd.f32 %v2217, %v2218
        %v2220 = vrot.slane %v2219, 1
        %v2221 = vadd.f32 %v2219, %v2220
        %v2222 = vsel %vm1102, %v2178, 0.0
        %v2223 = vrot.slane %v2222, 4
        %v2224 = vadd.f32 %v2222, %v2223
        %v2225 = vrot.slane %v2224, 2
        %v2226 = vadd.f32 %v2224, %v2225
        %v2227 = vrot.slane %v2226, 1
        %v2228 = vadd.f32 %v2226, %v2227
        %v2229 = vsel %vm1102, %v2179, 0.0
        %v2230 = vrot.slane %v2229, 4
        %v2231 = vadd.f32 %v2229, %v2230
        %v2232 = vrot.slane %v2231, 2
        %v2233 = vadd.f32 %v2231, %v2232
        %v2234 = vrot.slane %v2233, 1
        %v2235 = vadd.f32 %v2233, %v2234
        %v2244 = vsel %vm1584, %v2193, %v2186
        %v2245 = vsel %vm1586, %v2200, %v2244
        %v2246 = vsel %vm1588, %v2207, %v2245
        %v2247 = vsel %vm1590, %v2214, %v2246
        %v2248 = vsel %vm1592, %v2221, %v2247
        %v2249 = vsel %vm1594, %v2228, %v2248
        %v2250 = vsel %vm1596, %v2235, %v2249
        %v2252 = vadd.f32 %v2139, %v2250
        %2253 = vset.pattern.permute.xlu0 3
        %2254 = vperm.xlu0 %2253, %v1791
        %v2255 = vpop.permute.xlu0 %2254
        %v2257 = vmul.f32 %v2255, %v530
        %2258 = vset.pattern.permute.xlu0 3
        %2259 = vperm.xlu0 %2258, %v1882
        %v2260 = vpop.permute.xlu0 %2259
        %2262 = vset.pattern.permute.xlu0 3
        %2263 = vperm.xlu0 %2262, %v1883
        %v2264 = vpop.permute.xlu0 %2263
        %2266 = vset.pattern.permute.xlu0 3
        %2267 = vperm.xlu0 %2266, %v1884
        %v2268 = vpop.permute.xlu0 %2267
        %2270 = vset.pattern.permute.xlu0 3
        %2271 = vperm.xlu0 %2270, %v1885
        %v2272 = vpop.permute.xlu0 %2271
        %2274 = vset.pattern.permute.xlu0 3
        %2275 = vperm.xlu0 %2274, %v1886
        %v2276 = vpop.permute.xlu0 %2275
        %2278 = vset.pattern.permute.xlu0 3
        %2279 = vperm.xlu0 %2278, %v1887
        %v2280 = vpop.permute.xlu0 %2279
        %2282 = vset.pattern.permute.xlu0 3
        %2283 = vperm.xlu0 %2282, %v1888
        %v2284 = vpop.permute.xlu0 %2283
        %2286 = vset.pattern.permute.xlu0 3
        %2287 = vperm.xlu0 %2286, %v1889
        %v2288 = vpop.permute.xlu0 %2287
        %v2290 = vmul.f32 %v2260, %v1090
        %v2291 = vmul.f32 %v2264, %v1091
        %v2292 = vmul.f32 %v2268, %v1092
        %v2293 = vmul.f32 %v2272, %v1093
        %v2294 = vmul.f32 %v2276, %v1094
        %v2295 = vmul.f32 %v2280, %v1095
        %v2296 = vmul.f32 %v2284, %v1096
        %v2297 = vmul.f32 %v2288, %v1097
        %v2298 = vsel %vm1102, %v2290, 0.0
        %v2299 = vrot.slane %v2298, 4
        %v2300 = vadd.f32 %v2298, %v2299
        %v2301 = vrot.slane %v2300, 2
        %v2302 = vadd.f32 %v2300, %v2301
        %v2303 = vrot.slane %v2302, 1
        %v2304 = vadd.f32 %v2302, %v2303
        %v2305 = vsel %vm1102, %v2291, 0.0
        %v2306 = vrot.slane %v2305, 4
        %v2307 = vadd.f32 %v2305, %v2306
        %v2308 = vrot.slane %v2307, 2
        %v2309 = vadd.f32 %v2307, %v2308
        %v2310 = vrot.slane %v2309, 1
        %v2311 = vadd.f32 %v2309, %v2310
        %v2312 = vsel %vm1102, %v2292, 0.0
        %v2313 = vrot.slane %v2312, 4
        %v2314 = vadd.f32 %v2312, %v2313
        %v2315 = vrot.slane %v2314, 2
        %v2316 = vadd.f32 %v2314, %v2315
        %v2317 = vrot.slane %v2316, 1
        %v2318 = vadd.f32 %v2316, %v2317
        %v2319 = vsel %vm1102, %v2293, 0.0
        %v2320 = vrot.slane %v2319, 4
        %v2321 = vadd.f32 %v2319, %v2320
        %v2322 = vrot.slane %v2321, 2
        %v2323 = vadd.f32 %v2321, %v2322
        %v2324 = vrot.slane %v2323, 1
        %v2325 = vadd.f32 %v2323, %v2324
        %v2326 = vsel %vm1102, %v2294, 0.0
        %v2327 = vrot.slane %v2326, 4
        %v2328 = vadd.f32 %v2326, %v2327
        %v2329 = vrot.slane %v2328, 2
        %v2330 = vadd.f32 %v2328, %v2329
        %v2331 = vrot.slane %v2330, 1
        %v2332 = vadd.f32 %v2330, %v2331
        %v2333 = vsel %vm1102, %v2295, 0.0
        %v2334 = vrot.slane %v2333, 4
        %v2335 = vadd.f32 %v2333, %v2334
        %v2336 = vrot.slane %v2335, 2
        %v2337 = vadd.f32 %v2335, %v2336
        %v2338 = vrot.slane %v2337, 1
        %v2339 = vadd.f32 %v2337, %v2338
        %v2340 = vsel %vm1102, %v2296, 0.0
        %v2341 = vrot.slane %v2340, 4
        %v2342 = vadd.f32 %v2340, %v2341
        %v2343 = vrot.slane %v2342, 2
        %v2344 = vadd.f32 %v2342, %v2343
        %v2345 = vrot.slane %v2344, 1
        %v2346 = vadd.f32 %v2344, %v2345
        %v2347 = vsel %vm1102, %v2297, 0.0
        %v2348 = vrot.slane %v2347, 4
        %v2349 = vadd.f32 %v2347, %v2348
        %v2350 = vrot.slane %v2349, 2
        %v2351 = vadd.f32 %v2349, %v2350
        %v2352 = vrot.slane %v2351, 1
        %v2353 = vadd.f32 %v2351, %v2352
        %v2362 = vsel %vm1584, %v2311, %v2304
        %v2363 = vsel %vm1586, %v2318, %v2362
        %v2364 = vsel %vm1588, %v2325, %v2363
        %v2365 = vsel %vm1590, %v2332, %v2364
        %v2366 = vsel %vm1592, %v2339, %v2365
        %v2367 = vsel %vm1594, %v2346, %v2366
        %v2368 = vsel %vm1596, %v2353, %v2367
        %v2370 = vadd.f32 %v2257, %v2368
        %2372 = vrot.lane.b32.xlu0 %v2134, 32
        %v2373 = vpop.permute.xlu0 %2372
        %2376 = vrot.lane.b32.xlu0 %v2252, 64
        %v2377 = vpop.permute.xlu0 %2376
        %2380 = vrot.lane.b32.xlu0 %v2370, 96
        %v2381 = vpop.permute.xlu0 %2380
        %v2383 = vsel %vm1102, %v2016, %v2373
        %vm2384 = vcmask 523264
        %v2385 = vsel %vm2384, %v2383, %v2377
        %vm2386 = vcmask 785408
        %v2387 = vsel %vm2386, %v2385, %v2381
        %v2388 = vld [vmem:[%s11] sm:$0xff]
        %v2389 = vld [vmem:[%s11 + $0x8] sm:$0xff]
        %v2390 = vld [vmem:[%s11 + $0x10] sm:$0xff]
        %v2391 = vld [vmem:[%s11 + $0x18] sm:$0xff]
        %v2392 = vld [vmem:[%s11 + $0x20] sm:$0xff]
        %v2393 = vld [vmem:[%s11 + $0x28] sm:$0xff]
        %v2394 = vld [vmem:[%s11 + $0x30] sm:$0xff]
        %v2395 = vld [vmem:[%s11 + $0x38] sm:$0xff]
        %v2396 = vld [vmem:[%s11 + $0x40] sm:$0xff]
        %v2397 = vld [vmem:[%s11 + $0x48] sm:$0xff]
        %v2398 = vld [vmem:[%s11 + $0x50] sm:$0xff]
        %v2399 = vld [vmem:[%s11 + $0x58] sm:$0xff]
        %v2400 = vld [vmem:[%s11 + $0x60] sm:$0xff]
        %v2401 = vld [vmem:[%s11 + $0x68] sm:$0xff]
        %v2402 = vld [vmem:[%s11 + $0x70] sm:$0xff]
        %v2403 = vld [vmem:[%s11 + $0x78] sm:$0xff]
        %2404 = vmatprep.subr.mxu0 0.0
        %2405 = vmatpush1.msra.mxu0 %v2388
        %2406 = vmatprep.subr.mxu0 0.0
        %2407 = vmatpush1.msra.mxu0 %v2389
        %2408 = vmatprep.subr.mxu0 0.0
        %2409 = vmatpush1.msra.mxu0 %v2390
        %2410 = vmatprep.subr.mxu0 0.0
        %2411 = vmatpush1.msra.mxu0 %v2391
        %2412 = vmatprep.subr.mxu0 0.0
        %2413 = vmatpush1.msra.mxu0 %v2392
        %2414 = vmatprep.subr.mxu0 0.0
        %2415 = vmatpush1.msra.mxu0 %v2393
        %2416 = vmatprep.subr.mxu0 0.0
        %2417 = vmatpush1.msra.mxu0 %v2394
        %2418 = vmatprep.subr.mxu0 0.0
        %2419 = vmatpush1.msra.mxu0 %v2395
        %2420 = vmatprep.subr.mxu0 0.0
        %2421 = vmatpush1.msra.mxu0 %v2396
        %2422 = vmatprep.subr.mxu0 0.0
        %2423 = vmatpush1.msra.mxu0 %v2397
        %2424 = vmatprep.subr.mxu0 0.0
        %2425 = vmatpush1.msra.mxu0 %v2398
        %2426 = vmatprep.subr.mxu0 0.0
        %2427 = vmatpush1.msra.mxu0 %v2399
        %2428 = vmatprep.subr.mxu0 0.0
        %2429 = vmatpush1.msra.mxu0 %v2400
        %2430 = vmatprep.subr.mxu0 0.0
        %2431 = vmatpush1.msra.mxu0 %v2401
        %2432 = vmatprep.subr.mxu0 0.0
        %2433 = vmatpush1.msra.mxu0 %v2402
        %2434 = vmatprep.subr.mxu0 0.0
        %2435 = vmatpush1.msra.mxu0 %v2403
        %2436 = vmatprep.subr.mxu0 0.0
        %2437 = vmatpush1.msra.mxu0 0.0
        %2438 = vmatprep.subr.mxu0 0.0
        %2439 = vmatpush1.msra.mxu0 0.0
        %2440 = vmatprep.subr.mxu0 0.0
        %2441 = vmatpush1.msra.mxu0 0.0
        %2442 = vmatprep.subr.mxu0 0.0
        %2443 = vmatpush1.msra.mxu0 0.0
        %2444 = vmatprep.subr.mxu0 0.0
        %2445 = vmatpush1.msra.mxu0 0.0
        %2446 = vmatprep.subr.mxu0 0.0
        %2447 = vmatpush1.msra.mxu0 0.0
        %2448 = vmatprep.subr.mxu0 0.0
        %2449 = vmatpush1.msra.mxu0 0.0
        %2450 = vmatprep.subr.mxu0 0.0
        %2451 = vmatpush1.msra.mxu0 0.0
        %2452 = vmatprep.subr.mxu0 0.0
        %2453 = vmatpush1.msra.mxu0 0.0
        %2454 = vmatprep.subr.mxu0 0.0
        %2455 = vmatpush1.msra.mxu0 0.0
        %2456 = vmatprep.subr.mxu0 0.0
        %2457 = vmatpush1.msra.mxu0 0.0
        %2458 = vmatprep.subr.mxu0 0.0
        %2459 = vmatpush1.msra.mxu0 0.0
        %2460 = vmatprep.subr.mxu0 0.0
        %2461 = vmatpush1.msra.mxu0 0.0
        %2462 = vmatprep.subr.mxu0 0.0
        %2463 = vmatpush1.msra.mxu0 0.0
        %2464 = vmatprep.subr.mxu0 0.0
        %2465 = vmatpush1.msra.mxu0 0.0
        %2466 = vmatprep.subr.mxu0 0.0
        %2467 = vmatpush1.msra.mxu0 0.0
        %2468 = vmatprep.mubr.f32.mxu0 0.0
        %2469 = vmatmul.mubr.f32.gmra.mrb[0].mxu0 %v2387
        %v2470 = vpop.f32.mrb[0].mxu0
        %v2471 = vadd.f32 0.0, %v2470
        %v2472 = vpop.f32.mrb[0].mxu0
        %2473 = vdwg.mxu0
        %v2474 = vmul.f32 %v2471, 0.25
        %v2475 = vmax.f32 %v2474, 0.0
        %v2476 = vld [vmem:[%s12] sm:$0x1]
        %v2478 = vlaneseq
        %v2479 = vshrl.u32 %v2478, 7
        %v2480 = vsub.s32 0, %v2479
        %v2481 = vrot.slane %v2476, %v2480
        %v2483 = vadd.f32 %v2475, %v2481
        %2484 = vst [vmem:[%s524] sm:$0xff] %v2483
        %s2485 = sand.u32 %s315, 1
        %s2486 = scalar_lea.sflag [#allocation6], %s2485
        %s2487 = sand.u32 %s315, 1
        %s2488 = smul.addr %s2487, 8
        %s2489 = scalar_lea.vmem [#allocation13], %s2488
        // Predicated region
        $region89: #{tpu_custom_call.1} parent=67 // pred_check
          %p2490 = pneg %p325
        $region90: #{tpu_custom_call.1} parent=67 // pred_check_branch
          %2492 = sbr.rel (%p2490) target = $region92
        $region91: #{tpu_custom_call.1} parent=67 // pred_region
          %s2494 = ssub.s32 128, 128
          %2495 = vsyncadd %s2486, %s2494
          %s2496 = smul.addr %s40, 128
          %s2497 = scalar_lea.hbm %s13, %s2496
          %s2499 = sshll.u32 %s2489, 4
          %s2500 = int_to_ptr.vmem [resolvable:$true] %s2499
          %2502 = dma.vmem_to_hbm [thread:$0]  %s2500, 128, %s2497, %s2486
        $region92: #{tpu_custom_call.1} parent=67 // pred_fallthru
          _
      $region68: #{tpu_custom_call.1} parent=5 // pred_fallthru
        _
      %p2503 = scmp.le.s32.totalorder 2, %s35
      // Predicated region
      $region93: #{tpu_custom_call.1} parent=5 // pred_check
        %p2504 = pneg %p2503
      $region94: #{tpu_custom_call.1} parent=5 // pred_check_branch
        %2506 = sbr.rel (%p2504) target = $region96
      $region95: #{tpu_custom_call.1} parent=5 // pred_region
        %s2507 = ssub.s32 %s35, 2
        // Predicated region
        $region97: #{tpu_custom_call.1} parent=95 // pred_check
          %p2508 = pneg %p331
        $region98: #{tpu_custom_call.1} parent=95 // pred_check_branch
          %2510 = sbr.rel (%p2508) target = $region100
        $region99: #{tpu_custom_call.1} parent=95 // pred_region
          %s2511 = sand.u32 %s316, 1
          %s2512 = scalar_lea.sflag [#allocation6], %s2511
          %s2513 = sand.u32 %s316, 1
          %s2514 = smul.addr %s2513, 8
          %s2515 = scalar_lea.vmem [#allocation13], %s2514
          %2516 = dma.done %s2512, 128
        $region100: #{tpu_custom_call.1} parent=95 // pred_fallthru
          _
      $region96: #{tpu_custom_call.1} parent=5 // pred_fallthru
        _
    $region6: #{tpu_custom_call.1} parent=1 // loop_footer
      %s39 = sadd.s32 1, %s35
    $region7: #{tpu_custom_call.1} parent=1 // loop_footer_branch
      %34 = sbr.rel target = $region3
    $region8: #{tpu_custom_call.1} parent=1 // loop_exit
      _
    %2517 = vsyncpa [#allocation5], 1
    %s2518 = scalar_lea.sflag [#allocation5], 1
    %2519 = vsyncpa %s2518, 1
    %2520 = vsyncpa [#allocation8], 1
    %s2521 = scalar_lea.sflag [#allocation8], 1
    %2522 = vsyncpa %s2521, 1
    %2523 = vsyncpa [#allocation11], 1
    %2524 = vsyncpa [#allocation6], 1
    %s2525 = scalar_lea.sflag [#allocation6], 1
    %2526 = vsyncpa %s2525, 1

</llo_original>
